<compile_context>
chip_gen: v5e
topology: v5e:2x2
jax: 0.10.0
libtpu: 0.0.40
codegen_flags: <defaults>
</compile_context>

<pallas_src>
import functools

import numpy as np
import jax
import jax.numpy as jnp
from jax.experimental import pallas as pl
from jax.experimental.pallas import tpu as pltpu


def _spec(block_shape, index_map, *, buffers=None):
    """BlockSpec helper; requests explicit buffer depth when supported."""
    if buffers is not None and hasattr(pl, "Buffered"):
        try:
            return pl.BlockSpec(block_shape, index_map,
                                pipeline_mode=pl.Buffered(buffers))
        except TypeError:
            pass  # older API without pipeline_mode — fall back to default
    return pl.BlockSpec(block_shape, index_map)


def _srm0_kernel(s_ref, w_ref, r0_ref, spike_ref, r_ref, x_scr, *,
                 tb: int, b: int, thr: float, s_resident: bool):
    """One (n_tile, time_block) grid step.

    s_ref:     [T*B, in_f] (resident) or [Tb*B, in_f] (streamed), matmul dtype
    w_ref:     [in_f, tn]   matmul-dtype W^T stripe (resident across all t)
    r0_ref:    [B, tn]      f32 initial reset state for this n tile
    spike_ref: [Tb*B, tn]   spike output block (bf16)
    r_ref:     [B, tn]      f32 reset state, carried across time blocks in VMEM
    x_scr:     [Tb*B, tn]   f32 scratch for the block's synapse sums
    """
    t = pl.program_id(1)
    tbb = tb * b

    # Seed the reset-state carry for this output column tile at the first time
    # block.  r_ref is a revisited output block (constant index along t), so it
    # stays VMEM-resident across all time blocks of this n tile.
    @pl.when(t == 0)
    def _():
        r_ref[...] = r0_ref[...]

    if s_resident:
        # Whole S sequence lives in VMEM: slice this block's Tb*B rows.
        start = pl.multiple_of(t * tbb, tbb)
        s_blk = s_ref[pl.ds(start, tbb), :]
    else:
        s_blk = s_ref[...]

    # ONE MXU matmul covering all Tb timesteps of this block (X has no time
    # recurrence); bf16 operands, f32 accumulation, result parked in VMEM.
    x_scr[...] = jnp.dot(s_blk, w_ref[...], preferred_element_type=jnp.float32)

    # Elementwise spike/reset recurrence over the Tb timesteps.  Static unroll:
    # per-iteration work is a tiny [B, tn] VPU slab loaded from the scratch, so
    # live ranges stay small even though this is a Python loop.
    r = r_ref[...]
    for i in range(tb):
        rows = slice(i * b, (i + 1) * b)
        x_i = x_scr[rows, :]
        # Folded threshold: O = H(u_rest + X*R - u_th) == (X*R >= u_th - u_rest).
        # matterhorn's Rectangular surrogate forward returns 1 at exactly 0,
        # matching the >= comparison.
        spike = (x_i * r >= thr).astype(jnp.float32)
        # x_i is dead now: reuse its scratch rows (f32, sublane-aligned) to
        # stage the spikes; one dense bf16 store for the whole block below.
        x_scr[rows, :] = spike
        r = 1.0 - spike            # R(t) = 1 - O(t), uses the spike just made
    spike_ref[...] = x_scr[...].astype(spike_ref.dtype)
    r_ref[...] = r


@functools.partial(
    jax.jit,
    static_argnames=("tau_m", "u_threshold", "u_rest", "tn", "matmul_dtype",
                     "spike_dtype", "vmem_limit_bytes"))
def srm0_linear_forward(o_seq, s0, r0, w_t, *, tau_m=2.0, u_threshold=1.0,
                        u_rest=0.0, tn=256, matmul_dtype=jnp.bfloat16,
                        spike_dtype=jnp.bfloat16,
                        vmem_limit_bytes=48 * 1024 * 1024):
    """Run T SRM0Linear steps in one fused Pallas kernel.

    o_seq: [T, B, in_f]   input spikes for T timesteps
    s0:    [B, in_f]      synapse-response state entering step 0
    r0:    [B, out_f]     reset state entering step 0
    w_t:   [in_f, out_f]  weight already transposed from PyTorch's [out, in]
                          layout (transpose once per forward, never per step)
    returns (spikes [T, B, out_f] spike_dtype, s_final [B, in_f] f32,
             r_final [B, out_f] f32)
    """
    T, B, in_f = o_seq.shape
    assert w_t.shape[0] == in_f
    out_f = w_t.shape[1]

    md_bytes = np.dtype(matmul_dtype).itemsize
    spk_bytes = np.dtype(spike_dtype).itemsize

    # --- output-column tile (lane-dense, MXU-N-wide) ---
    tn = min(tn, out_f)
    if out_f % tn != 0 and out_f % 128 == 0:
        tn = 128
    assert out_f % tn == 0, "pad out_features to a multiple of 128"

    # --- time block: fill the MXU rows (Tb*B ~ 256) ---
    target_rows = 256
    tb = max(1, min(T, target_rows // max(B, 1)))
    while tb > 1 and (T % tb != 0 or (tb * B) % 8 != 0):
        tb -= 1
    if T % tb != 0 or (tb * B) % 8 != 0:
        tb = T                      # single full-extent block is always legal
    tbb = tb * B
    t_blocks = T // tb

    # Make the whole S sequence VMEM-resident when small: one HBM read total
    # instead of one per output tile.
    s_resident = (T * B * in_f * md_bytes) <= 4 * 1024 * 1024

    # Rough VMEM budget; shrink tn if the resident set would not fit.
    def vmem_est(tn_):
        w = in_f * tn_ * md_bytes                                   # Buffered(1)
        s = (T * B if s_resident else 2 * tbb) * in_f * md_bytes
        spk = 2 * tbb * tn_ * spk_bytes
        x = tbb * tn_ * 4
        r = 3 * B * tn_ * 4
        return w + s + spk + x + r

    while (tn > 128 and out_f % (tn // 2) == 0
           and vmem_est(tn) > 3 * vmem_limit_bytes // 4):
        tn //= 2
    n_tiles = out_f // tn

    # Synapse recursion S(t) = S(t-1)/tau + O(t): n-independent and tiny next
    # to the matmul; computed once here (f32 carry, bit-exact with the
    # reference) and emitted directly in matmul dtype — no extra f32
    # materialization + convert pass.
    inv_tau = jnp.float32(1.0 / tau_m)

    def synapse_step(s, o_t):
        s = inv_tau * s + o_t
        return s, s.astype(matmul_dtype)

    s_final, s_seq_md = jax.lax.scan(synapse_step, s0.astype(jnp.float32),
                                     o_seq.astype(jnp.float32))
    # [T, B, in_f] -> [T*B, in_f]: contiguous row-major reshape, no data move.
    s_flat = s_seq_md.reshape(T * B, in_f)

    w_md = w_t.astype(matmul_dtype)      # cast once for all T steps
    r0_f32 = r0.astype(jnp.float32)

    if s_resident:
        s_spec = _spec((T * B, in_f), lambda n, t: (0, 0), buffers=1)
    else:
        s_spec = _spec((tbb, in_f), lambda n, t: (t, 0))
    w_spec = _spec((in_f, tn), lambda n, t: (0, n), buffers=1)
    r0_spec = _spec((B, tn), lambda n, t: (0, n))
    spike_spec = pl.BlockSpec((tbb, tn), lambda n, t: (t, n))
    r_spec = pl.BlockSpec((B, tn), lambda n, t: (0, n))

    cost = pl.CostEstimate(
        flops=2 * T * B * in_f * out_f,
        transcendentals=0,
        bytes_accessed=(in_f * out_f * md_bytes                          # W once
                        + (1 if s_resident else n_tiles) * T * B * in_f * md_bytes
                        + T * B * out_f * spk_bytes                      # spikes
                        + 2 * B * out_f * 4))                            # r in/out

    kernel = functools.partial(_srm0_kernel, tb=tb, b=B,
                               thr=float(u_threshold) - float(u_rest),
                               s_resident=s_resident)

    spikes_flat, r_final = pl.pallas_call(
        kernel,
        grid=(n_tiles, t_blocks),
        in_specs=[s_spec, w_spec, r0_spec],
        out_specs=(spike_spec, r_spec),
        out_shape=(jax.ShapeDtypeStruct((T * B, out_f), spike_dtype),
                   jax.ShapeDtypeStruct((B, out_f), jnp.float32)),
        scratch_shapes=[pltpu.VMEM((tbb, tn), jnp.float32)],
        # In-place reset-state update: r0 HBM buffer aliases r_final.  Safe
        # because the time axis is innermost and each n column's writeback
        # happens after its own last time block (disjoint columns otherwise).
        input_output_aliases={2: 1},
        compiler_params=pltpu.CompilerParams(
            dimension_semantics=("parallel", "arbitrary"),
            vmem_limit_bytes=vmem_limit_bytes),
        cost_estimate=cost,
    )(s_flat, w_md, r0_f32)

    spikes = spikes_flat.reshape(T, B, out_f)
    return spikes, s_final, r_final


def srm0_linear_forward_ref(o_seq, s0, r0, w_t, tau_m=2.0, u_threshold=1.0,
                            u_rest=0.0, matmul_dtype=jnp.bfloat16):
    """Pure-JAX reference mirroring the PyTorch module step by step.

    Uses the same bf16-operand / f32-accumulation matmul as the kernel so the
    hard-threshold spike comparison is exact.
    """
    inv_tau = jnp.float32(1.0 / tau_m)
    w_md = w_t.astype(matmul_dtype)

    def step(carry, o_t):
        s, r = carry
        s = inv_tau * s + o_t                                  # S(t)
        x = jnp.dot(s.astype(matmul_dtype), w_md,
                    preferred_element_type=jnp.float32)        # X(t) = S(t) @ W^T
        u = u_rest + x * r                                     # U(t)
        spike = (u - u_threshold >= 0.0).astype(jnp.float32)   # O(t)
        r = 1.0 - spike                                        # R(t)
        return (s, r), spike

    (s_final, r_final), spikes = jax.lax.scan(
        step, (s0.astype(jnp.float32), r0.astype(jnp.float32)),
        o_seq.astype(jnp.float32))
    return spikes, s_final, r_final


if __name__ == "__main__":
    # Small but hardware-friendly shapes: out_f multiple of 256 (two n tiles at
    # tn=256, exercising the parallel axis), B multiple of 8, T large enough
    # for two time blocks (Tb=32), so the VMEM r-carry across blocks is tested.
    T, B, IN_F, OUT_F = 64, 8, 128, 512
    TAU_M, U_TH, U_REST = 2.0, 1.0, 0.0

    key = jax.random.PRNGKey(0)
    k_w, k_o = jax.random.split(key)

    # kaiming_uniform_(a=sqrt(5)) -> Uniform(-1/sqrt(fan_in), 1/sqrt(fan_in)),
    # created in PyTorch's [out, in] layout, then transposed ONCE for all T.
    bound = 1.0 / (IN_F ** 0.5)
    weight = jax.random.uniform(k_w, (OUT_F, IN_F), jnp.float32,
                                minval=-bound, maxval=bound)
    w_t = weight.T                       # [in, out], hoisted out of the time loop

    # 0/1 input spike trains for T timesteps.
    o_seq = (jax.random.uniform(k_o, (T, B, IN_F)) > 0.5).astype(jnp.float32)

    # module.reset(): s = 0.0, r = 0.0 (init_tensor broadcasts on first use).
    s0 = jnp.zeros((B, IN_F), jnp.float32)
    r0 = jnp.zeros((B, OUT_F), jnp.float32)

    spikes, s_fin, r_fin = srm0_linear_forward(
        o_seq, s0, r0, w_t, tau_m=TAU_M, u_threshold=U_TH, u_rest=U_REST)
    jax.block_until_ready((spikes, s_fin, r_fin))

    spikes_ref, s_ref, r_ref = srm0_linear_forward_ref(
        o_seq, s0, r0, w_t, TAU_M, U_TH, U_REST)

    assert spikes.shape == (T, B, OUT_F)
    assert jnp.array_equal(spikes.astype(jnp.float32), spikes_ref), \
        "spike history mismatch"
    assert jnp.allclose(s_fin, s_ref, atol=1e-6), "synapse state mismatch"
    assert jnp.array_equal(r_fin, r_ref), "reset state mismatch"

    print("KERNEL_OK")
</pallas_src>

<mosaic_0001>
module attributes {stable_mosaic.version = 11 : i64} {
  func.func @_srm0_kernel(%arg0: i32, %arg1: i32, %arg2: memref<512x128xbf16, #tpu.memory_space<vmem>>, %arg3: memref<128x256xbf16, #tpu.memory_space<vmem>>, %arg4: memref<8x256xf32, #tpu.memory_space<vmem>>, %arg5: memref<256x256xbf16, #tpu.memory_space<vmem>>, %arg6: memref<8x256xf32, #tpu.memory_space<vmem>>, %arg7: memref<256x256xf32, #tpu.memory_space<vmem>>) attributes {dimension_semantics = [#tpu.dimension_semantics<parallel>, #tpu.dimension_semantics<arbitrary>], iteration_bounds = array<i64: 2, 2>, scalar_prefetch = 0 : i64, scratch_operands = 1 : i64, tpu.core_type = #tpu.core_type<tc>, window_params = [{pipeline_mode = #tpu.pipeline_mode<synchronous>, transform_indices = @transform_0, window_bounds = array<i64: 512, 128>}, {pipeline_mode = #tpu.pipeline_mode<synchronous>, transform_indices = @transform_1, window_bounds = array<i64: 128, 256>}, {transform_indices = @transform_2, window_bounds = array<i64: 8, 256>}, {transform_indices = @transform_3, window_bounds = array<i64: 256, 256>}, {transform_indices = @transform_4, window_bounds = array<i64: 8, 256>}]} {
    %c0_i32 = arith.constant 0 : i32
    %0 = arith.cmpi eq, %arg1, %c0_i32 : i32
    %1 = arith.extui %0 : i1 to i32
    %c0_i32_0 = arith.constant 0 : i32
    %2 = arith.cmpi ne, %1, %c0_i32_0 : i32
    scf.if %2 {
      %c0_174 = arith.constant 0 : index
      %c0_175 = arith.constant 0 : index
      %303 = vector.load %arg4[%c0_174, %c0_175] : memref<8x256xf32, #tpu.memory_space<vmem>>, vector<8x256xf32>
      %c0_176 = arith.constant 0 : index
      %c0_177 = arith.constant 0 : index
      %304 = vector.load %arg6[%c0_176, %c0_177] : memref<8x256xf32, #tpu.memory_space<vmem>>, vector<8x256xf32>
      tpu.vector_store %arg6[%c0_176, %c0_177], %303 {strides = array<i32>} : memref<8x256xf32, #tpu.memory_space<vmem>>, vector<8x256xf32>,
    } else {
    }
    %c256_i32 = arith.constant 256 : i32
    %3 = arith.muli %arg1, %c256_i32 : i32
    %4 = tpu.assume_multiple %3, 256 : i32
    %5 = arith.index_cast %4 : i32 to index
    %c0 = arith.constant 0 : index
    %6 = vector.load %arg2[%5, %c0] : memref<512x128xbf16, #tpu.memory_space<vmem>>, vector<256x128xbf16>
    %c0_1 = arith.constant 0 : index
    %c0_2 = arith.constant 0 : index
    %7 = vector.load %arg3[%c0_1, %c0_2] : memref<128x256xbf16, #tpu.memory_space<vmem>>, vector<128x256xbf16>
    %cst = arith.constant dense<0.000000e+00> : vector<256x256xf32>
    %8 = tpu.matmul %6, %7, %cst {dimension_numbers = #tpu.dot_dimension_numbers<[1], [0], [0], [1], [0, 0, 1, 1], [], []>} : vector<256x128xbf16>, vector<128x256xbf16>, vector<256x256xf32> -> vector<256x256xf32>
    %c0_3 = arith.constant 0 : index
    %c0_4 = arith.constant 0 : index
    %9 = vector.load %arg7[%c0_3, %c0_4] : memref<256x256xf32, #tpu.memory_space<vmem>>, vector<256x256xf32>
    tpu.vector_store %arg7[%c0_3, %c0_4], %8 {strides = array<i32>} : memref<256x256xf32, #tpu.memory_space<vmem>>, vector<256x256xf32>,
    %c0_5 = arith.constant 0 : index
    %c0_6 = arith.constant 0 : index
    %10 = vector.load %arg6[%c0_5, %c0_6] : memref<8x256xf32, #tpu.memory_space<vmem>>, vector<8x256xf32>
    %c0_7 = arith.constant 0 : index
    %c0_8 = arith.constant 0 : index
    %11 = vector.load %arg7[%c0_7, %c0_8] : memref<256x256xf32, #tpu.memory_space<vmem>>, vector<8x256xf32>
    %12 = arith.mulf %11, %10 : vector<8x256xf32>
    %cst_9 = arith.constant 1.000000e+00 : f32
    %13 = vector.broadcast %cst_9 : f32 to vector<8x256xf32>
    %14 = arith.cmpf oge, %12, %13 : vector<8x256xf32>
    %15 = arith.extui %14 : vector<8x256xi1> to vector<8x256xi32>
    %16 = arith.sitofp %15 : vector<8x256xi32> to vector<8x256xf32>
    %c0_10 = arith.constant 0 : index
    %c0_11 = arith.constant 0 : index
    %17 = vector.load %arg7[%c0_10, %c0_11] : memref<256x256xf32, #tpu.memory_space<vmem>>, vector<8x256xf32>
    tpu.vector_store %arg7[%c0_10, %c0_11], %16 {strides = array<i32>} : memref<256x256xf32, #tpu.memory_space<vmem>>, vector<8x256xf32>,
    %cst_12 = arith.constant 1.000000e+00 : f32
    %18 = vector.broadcast %cst_12 : f32 to vector<8x256xf32>
    %19 = arith.subf %18, %16 : vector<8x256xf32>
    %c8 = arith.constant 8 : index
    %c0_13 = arith.constant 0 : index
    %20 = vector.load %arg7[%c8, %c0_13] : memref<256x256xf32, #tpu.memory_space<vmem>>, vector<8x256xf32>
    %21 = arith.mulf %20, %19 : vector<8x256xf32>
    %cst_14 = arith.constant 1.000000e+00 : f32
    %22 = vector.broadcast %cst_14 : f32 to vector<8x256xf32>
    %23 = arith.cmpf oge, %21, %22 : vector<8x256xf32>
    %24 = arith.extui %23 : vector<8x256xi1> to vector<8x256xi32>
    %25 = arith.sitofp %24 : vector<8x256xi32> to vector<8x256xf32>
    %c8_15 = arith.constant 8 : index
    %c0_16 = arith.constant 0 : index
    %26 = vector.load %arg7[%c8_15, %c0_16] : memref<256x256xf32, #tpu.memory_space<vmem>>, vector<8x256xf32>
    tpu.vector_store %arg7[%c8_15, %c0_16], %25 {strides = array<i32>} : memref<256x256xf32, #tpu.memory_space<vmem>>, vector<8x256xf32>,
    %cst_17 = arith.constant 1.000000e+00 : f32
    %27 = vector.broadcast %cst_17 : f32 to vector<8x256xf32>
    %28 = arith.subf %27, %25 : vector<8x256xf32>
    %c16 = arith.constant 16 : index
    %c0_18 = arith.constant 0 : index
    %29 = vector.load %arg7[%c16, %c0_18] : memref<256x256xf32, #tpu.memory_space<vmem>>, vector<8x256xf32>
    %30 = arith.mulf %29, %28 : vector<8x256xf32>
    %cst_19 = arith.constant 1.000000e+00 : f32
    %31 = vector.broadcast %cst_19 : f32 to vector<8x256xf32>
    %32 = arith.cmpf oge, %30, %31 : vector<8x256xf32>
    %33 = arith.extui %32 : vector<8x256xi1> to vector<8x256xi32>
    %34 = arith.sitofp %33 : vector<8x256xi32> to vector<8x256xf32>
    %c16_20 = arith.constant 16 : index
    %c0_21 = arith.constant 0 : index
    %35 = vector.load %arg7[%c16_20, %c0_21] : memref<256x256xf32, #tpu.memory_space<vmem>>, vector<8x256xf32>
    tpu.vector_store %arg7[%c16_20, %c0_21], %34 {strides = array<i32>} : memref<256x256xf32, #tpu.memory_space<vmem>>, vector<8x256xf32>,
    %cst_22 = arith.constant 1.000000e+00 : f32
    %36 = vector.broadcast %cst_22 : f32 to vector<8x256xf32>
    %37 = arith.subf %36, %34 : vector<8x256xf32>
    %c24 = arith.constant 24 : index
    %c0_23 = arith.constant 0 : index
    %38 = vector.load %arg7[%c24, %c0_23] : memref<256x256xf32, #tpu.memory_space<vmem>>, vector<8x256xf32>
    %39 = arith.mulf %38, %37 : vector<8x256xf32>
    %cst_24 = arith.constant 1.000000e+00 : f32
    %40 = vector.broadcast %cst_24 : f32 to vector<8x256xf32>
    %41 = arith.cmpf oge, %39, %40 : vector<8x256xf32>
    %42 = arith.extui %41 : vector<8x256xi1> to vector<8x256xi32>
    %43 = arith.sitofp %42 : vector<8x256xi32> to vector<8x256xf32>
    %c24_25 = arith.constant 24 : index
    %c0_26 = arith.constant 0 : index
    %44 = vector.load %arg7[%c24_25, %c0_26] : memref<256x256xf32, #tpu.memory_space<vmem>>, vector<8x256xf32>
    tpu.vector_store %arg7[%c24_25, %c0_26], %43 {strides = array<i32>} : memref<256x256xf32, #tpu.memory_space<vmem>>, vector<8x256xf32>,
    %cst_27 = arith.constant 1.000000e+00 : f32
    %45 = vector.broadcast %cst_27 : f32 to vector<8x256xf32>
    %46 = arith.subf %45, %43 : vector<8x256xf32>
    %c32 = arith.constant 32 : index
    %c0_28 = arith.constant 0 : index
    %47 = vector.load %arg7[%c32, %c0_28] : memref<256x256xf32, #tpu.memory_space<vmem>>, vector<8x256xf32>
    %48 = arith.mulf %47, %46 : vector<8x256xf32>
    %cst_29 = arith.constant 1.000000e+00 : f32
    %49 = vector.broadcast %cst_29 : f32 to vector<8x256xf32>
    %50 = arith.cmpf oge, %48, %49 : vector<8x256xf32>
    %51 = arith.extui %50 : vector<8x256xi1> to vector<8x256xi32>
    %52 = arith.sitofp %51 : vector<8x256xi32> to vector<8x256xf32>
    %c32_30 = arith.constant 32 : index
    %c0_31 = arith.constant 0 : index
    %53 = vector.load %arg7[%c32_30, %c0_31] : memref<256x256xf32, #tpu.memory_space<vmem>>, vector<8x256xf32>
    tpu.vector_store %arg7[%c32_30, %c0_31], %52 {strides = array<i32>} : memref<256x256xf32, #tpu.memory_space<vmem>>, vector<8x256xf32>,
    %cst_32 = arith.constant 1.000000e+00 : f32
    %54 = vector.broadcast %cst_32 : f32 to vector<8x256xf32>
    %55 = arith.subf %54, %52 : vector<8x256xf32>
    %c40 = arith.constant 40 : index
    %c0_33 = arith.constant 0 : index
    %56 = vector.load %arg7[%c40, %c0_33] : memref<256x256xf32, #tpu.memory_space<vmem>>, vector<8x256xf32>
    %57 = arith.mulf %56, %55 : vector<8x256xf32>
    %cst_34 = arith.constant 1.000000e+00 : f32
    %58 = vector.broadcast %cst_34 : f32 to vector<8x256xf32>
    %59 = arith.cmpf oge, %57, %58 : vector<8x256xf32>
    %60 = arith.extui %59 : vector<8x256xi1> to vector<8x256xi32>
    %61 = arith.sitofp %60 : vector<8x256xi32> to vector<8x256xf32>
    %c40_35 = arith.constant 40 : index
    %c0_36 = arith.constant 0 : index
    %62 = vector.load %arg7[%c40_35, %c0_36] : memref<256x256xf32, #tpu.memory_space<vmem>>, vector<8x256xf32>
    tpu.vector_store %arg7[%c40_35, %c0_36], %61 {strides = array<i32>} : memref<256x256xf32, #tpu.memory_space<vmem>>, vector<8x256xf32>,
    %cst_37 = arith.constant 1.000000e+00 : f32
    %63 = vector.broadcast %cst_37 : f32 to vector<8x256xf32>
    %64 = arith.subf %63, %61 : vector<8x256xf32>
    %c48 = arith.constant 48 : index
    %c0_38 = arith.constant 0 : index
    %65 = vector.load %arg7[%c48, %c0_38] : memref<256x256xf32, #tpu.memory_space<vmem>>, vector<8x256xf32>
    %66 = arith.mulf %65, %64 : vector<8x256xf32>
    %cst_39 = arith.constant 1.000000e+00 : f32
    %67 = vector.broadcast %cst_39 : f32 to vector<8x256xf32>
    %68 = arith.cmpf oge, %66, %67 : vector<8x256xf32>
    %69 = arith.extui %68 : vector<8x256xi1> to vector<8x256xi32>
    %70 = arith.sitofp %69 : vector<8x256xi32> to vector<8x256xf32>
    %c48_40 = arith.constant 48 : index
    %c0_41 = arith.constant 0 : index
    %71 = vector.load %arg7[%c48_40, %c0_41] : memref<256x256xf32, #tpu.memory_space<vmem>>, vector<8x256xf32>
    tpu.vector_store %arg7[%c48_40, %c0_41], %70 {strides = array<i32>} : memref<256x256xf32, #tpu.memory_space<vmem>>, vector<8x256xf32>,
    %cst_42 = arith.constant 1.000000e+00 : f32
    %72 = vector.broadcast %cst_42 : f32 to vector<8x256xf32>
    %73 = arith.subf %72, %70 : vector<8x256xf32>
    %c56 = arith.constant 56 : index
    %c0_43 = arith.constant 0 : index
    %74 = vector.load %arg7[%c56, %c0_43] : memref<256x256xf32, #tpu.memory_space<vmem>>, vector<8x256xf32>
    %75 = arith.mulf %74, %73 : vector<8x256xf32>
    %cst_44 = arith.constant 1.000000e+00 : f32
    %76 = vector.broadcast %cst_44 : f32 to vector<8x256xf32>
    %77 = arith.cmpf oge, %75, %76 : vector<8x256xf32>
    %78 = arith.extui %77 : vector<8x256xi1> to vector<8x256xi32>
    %79 = arith.sitofp %78 : vector<8x256xi32> to vector<8x256xf32>
    %c56_45 = arith.constant 56 : index
    %c0_46 = arith.constant 0 : index
    %80 = vector.load %arg7[%c56_45, %c0_46] : memref<256x256xf32, #tpu.memory_space<vmem>>, vector<8x256xf32>
    tpu.vector_store %arg7[%c56_45, %c0_46], %79 {strides = array<i32>} : memref<256x256xf32, #tpu.memory_space<vmem>>, vector<8x256xf32>,
    %cst_47 = arith.constant 1.000000e+00 : f32
    %81 = vector.broadcast %cst_47 : f32 to vector<8x256xf32>
    %82 = arith.subf %81, %79 : vector<8x256xf32>
    %c64 = arith.constant 64 : index
    %c0_48 = arith.constant 0 : index
    %83 = vector.load %arg7[%c64, %c0_48] : memref<256x256xf32, #tpu.memory_space<vmem>>, vector<8x256xf32>
    %84 = arith.mulf %83, %82 : vector<8x256xf32>
    %cst_49 = arith.constant 1.000000e+00 : f32
    %85 = vector.broadcast %cst_49 : f32 to vector<8x256xf32>
    %86 = arith.cmpf oge, %84, %85 : vector<8x256xf32>
    %87 = arith.extui %86 : vector<8x256xi1> to vector<8x256xi32>
    %88 = arith.sitofp %87 : vector<8x256xi32> to vector<8x256xf32>
    %c64_50 = arith.constant 64 : index
    %c0_51 = arith.constant 0 : index
    %89 = vector.load %arg7[%c64_50, %c0_51] : memref<256x256xf32, #tpu.memory_space<vmem>>, vector<8x256xf32>
    tpu.vector_store %arg7[%c64_50, %c0_51], %88 {strides = array<i32>} : memref<256x256xf32, #tpu.memory_space<vmem>>, vector<8x256xf32>,
    %cst_52 = arith.constant 1.000000e+00 : f32
    %90 = vector.broadcast %cst_52 : f32 to vector<8x256xf32>
    %91 = arith.subf %90, %88 : vector<8x256xf32>
    %c72 = arith.constant 72 : index
    %c0_53 = arith.constant 0 : index
    %92 = vector.load %arg7[%c72, %c0_53] : memref<256x256xf32, #tpu.memory_space<vmem>>, vector<8x256xf32>
    %93 = arith.mulf %92, %91 : vector<8x256xf32>
    %cst_54 = arith.constant 1.000000e+00 : f32
    %94 = vector.broadcast %cst_54 : f32 to vector<8x256xf32>
    %95 = arith.cmpf oge, %93, %94 : vector<8x256xf32>
    %96 = arith.extui %95 : vector<8x256xi1> to vector<8x256xi32>
    %97 = arith.sitofp %96 : vector<8x256xi32> to vector<8x256xf32>
    %c72_55 = arith.constant 72 : index
    %c0_56 = arith.constant 0 : index
    %98 = vector.load %arg7[%c72_55, %c0_56] : memref<256x256xf32, #tpu.memory_space<vmem>>, vector<8x256xf32>
    tpu.vector_store %arg7[%c72_55, %c0_56], %97 {strides = array<i32>} : memref<256x256xf32, #tpu.memory_space<vmem>>, vector<8x256xf32>,
    %cst_57 = arith.constant 1.000000e+00 : f32
    %99 = vector.broadcast %cst_57 : f32 to vector<8x256xf32>
    %100 = arith.subf %99, %97 : vector<8x256xf32>
    %c80 = arith.constant 80 : index
    %c0_58 = arith.constant 0 : index
    %101 = vector.load %arg7[%c80, %c0_58] : memref<256x256xf32, #tpu.memory_space<vmem>>, vector<8x256xf32>
    %102 = arith.mulf %101, %100 : vector<8x256xf32>
    %cst_59 = arith.constant 1.000000e+00 : f32
    %103 = vector.broadcast %cst_59 : f32 to vector<8x256xf32>
    %104 = arith.cmpf oge, %102, %103 : vector<8x256xf32>
    %105 = arith.extui %104 : vector<8x256xi1> to vector<8x256xi32>
    %106 = arith.sitofp %105 : vector<8x256xi32> to vector<8x256xf32>
    %c80_60 = arith.constant 80 : index
    %c0_61 = arith.constant 0 : index
    %107 = vector.load %arg7[%c80_60, %c0_61] : memref<256x256xf32, #tpu.memory_space<vmem>>, vector<8x256xf32>
    tpu.vector_store %arg7[%c80_60, %c0_61], %106 {strides = array<i32>} : memref<256x256xf32, #tpu.memory_space<vmem>>, vector<8x256xf32>,
    %cst_62 = arith.constant 1.000000e+00 : f32
    %108 = vector.broadcast %cst_62 : f32 to vector<8x256xf32>
    %109 = arith.subf %108, %106 : vector<8x256xf32>
    %c88 = arith.constant 88 : index
    %c0_63 = arith.constant 0 : index
    %110 = vector.load %arg7[%c88, %c0_63] : memref<256x256xf32, #tpu.memory_space<vmem>>, vector<8x256xf32>
    %111 = arith.mulf %110, %109 : vector<8x256xf32>
    %cst_64 = arith.constant 1.000000e+00 : f32
    %112 = vector.broadcast %cst_64 : f32 to vector<8x256xf32>
    %113 = arith.cmpf oge, %111, %112 : vector<8x256xf32>
    %114 = arith.extui %113 : vector<8x256xi1> to vector<8x256xi32>
    %115 = arith.sitofp %114 : vector<8x256xi32> to vector<8x256xf32>
    %c88_65 = arith.constant 88 : index
    %c0_66 = arith.constant 0 : index
    %116 = vector.load %arg7[%c88_65, %c0_66] : memref<256x256xf32, #tpu.memory_space<vmem>>, vector<8x256xf32>
    tpu.vector_store %arg7[%c88_65, %c0_66], %115 {strides = array<i32>} : memref<256x256xf32, #tpu.memory_space<vmem>>, vector<8x256xf32>,
    %cst_67 = arith.constant 1.000000e+00 : f32
    %117 = vector.broadcast %cst_67 : f32 to vector<8x256xf32>
    %118 = arith.subf %117, %115 : vector<8x256xf32>
    %c96 = arith.constant 96 : index
    %c0_68 = arith.constant 0 : index
    %119 = vector.load %arg7[%c96, %c0_68] : memref<256x256xf32, #tpu.memory_space<vmem>>, vector<8x256xf32>
    %120 = arith.mulf %119, %118 : vector<8x256xf32>
    %cst_69 = arith.constant 1.000000e+00 : f32
    %121 = vector.broadcast %cst_69 : f32 to vector<8x256xf32>
    %122 = arith.cmpf oge, %120, %121 : vector<8x256xf32>
    %123 = arith.extui %122 : vector<8x256xi1> to vector<8x256xi32>
    %124 = arith.sitofp %123 : vector<8x256xi32> to vector<8x256xf32>
    %c96_70 = arith.constant 96 : index
    %c0_71 = arith.constant 0 : index
    %125 = vector.load %arg7[%c96_70, %c0_71] : memref<256x256xf32, #tpu.memory_space<vmem>>, vector<8x256xf32>
    tpu.vector_store %arg7[%c96_70, %c0_71], %124 {strides = array<i32>} : memref<256x256xf32, #tpu.memory_space<vmem>>, vector<8x256xf32>,
    %cst_72 = arith.constant 1.000000e+00 : f32
    %126 = vector.broadcast %cst_72 : f32 to vector<8x256xf32>
    %127 = arith.subf %126, %124 : vector<8x256xf32>
    %c104 = arith.constant 104 : index
    %c0_73 = arith.constant 0 : index
    %128 = vector.load %arg7[%c104, %c0_73] : memref<256x256xf32, #tpu.memory_space<vmem>>, vector<8x256xf32>
    %129 = arith.mulf %128, %127 : vector<8x256xf32>
    %cst_74 = arith.constant 1.000000e+00 : f32
    %130 = vector.broadcast %cst_74 : f32 to vector<8x256xf32>
    %131 = arith.cmpf oge, %129, %130 : vector<8x256xf32>
    %132 = arith.extui %131 : vector<8x256xi1> to vector<8x256xi32>
    %133 = arith.sitofp %132 : vector<8x256xi32> to vector<8x256xf32>
    %c104_75 = arith.constant 104 : index
    %c0_76 = arith.constant 0 : index
    %134 = vector.load %arg7[%c104_75, %c0_76] : memref<256x256xf32, #tpu.memory_space<vmem>>, vector<8x256xf32>
    tpu.vector_store %arg7[%c104_75, %c0_76], %133 {strides = array<i32>} : memref<256x256xf32, #tpu.memory_space<vmem>>, vector<8x256xf32>,
    %cst_77 = arith.constant 1.000000e+00 : f32
    %135 = vector.broadcast %cst_77 : f32 to vector<8x256xf32>
    %136 = arith.subf %135, %133 : vector<8x256xf32>
    %c112 = arith.constant 112 : index
    %c0_78 = arith.constant 0 : index
    %137 = vector.load %arg7[%c112, %c0_78] : memref<256x256xf32, #tpu.memory_space<vmem>>, vector<8x256xf32>
    %138 = arith.mulf %137, %136 : vector<8x256xf32>
    %cst_79 = arith.constant 1.000000e+00 : f32
    %139 = vector.broadcast %cst_79 : f32 to vector<8x256xf32>
    %140 = arith.cmpf oge, %138, %139 : vector<8x256xf32>
    %141 = arith.extui %140 : vector<8x256xi1> to vector<8x256xi32>
    %142 = arith.sitofp %141 : vector<8x256xi32> to vector<8x256xf32>
    %c112_80 = arith.constant 112 : index
    %c0_81 = arith.constant 0 : index
    %143 = vector.load %arg7[%c112_80, %c0_81] : memref<256x256xf32, #tpu.memory_space<vmem>>, vector<8x256xf32>
    tpu.vector_store %arg7[%c112_80, %c0_81], %142 {strides = array<i32>} : memref<256x256xf32, #tpu.memory_space<vmem>>, vector<8x256xf32>,
    %cst_82 = arith.constant 1.000000e+00 : f32
    %144 = vector.broadcast %cst_82 : f32 to vector<8x256xf32>
    %145 = arith.subf %144, %142 : vector<8x256xf32>
    %c120 = arith.constant 120 : index
    %c0_83 = arith.constant 0 : index
    %146 = vector.load %arg7[%c120, %c0_83] : memref<256x256xf32, #tpu.memory_space<vmem>>, vector<8x256xf32>
    %147 = arith.mulf %146, %145 : vector<8x256xf32>
    %cst_84 = arith.constant 1.000000e+00 : f32
    %148 = vector.broadcast %cst_84 : f32 to vector<8x256xf32>
    %149 = arith.cmpf oge, %147, %148 : vector<8x256xf32>
    %150 = arith.extui %149 : vector<8x256xi1> to vector<8x256xi32>
    %151 = arith.sitofp %150 : vector<8x256xi32> to vector<8x256xf32>
    %c120_85 = arith.constant 120 : index
    %c0_86 = arith.constant 0 : index
    %152 = vector.load %arg7[%c120_85, %c0_86] : memref<256x256xf32, #tpu.memory_space<vmem>>, vector<8x256xf32>
    tpu.vector_store %arg7[%c120_85, %c0_86], %151 {strides = array<i32>} : memref<256x256xf32, #tpu.memory_space<vmem>>, vector<8x256xf32>,
    %cst_87 = arith.constant 1.000000e+00 : f32
    %153 = vector.broadcast %cst_87 : f32 to vector<8x256xf32>
    %154 = arith.subf %153, %151 : vector<8x256xf32>
    %c128 = arith.constant 128 : index
    %c0_88 = arith.constant 0 : index
    %155 = vector.load %arg7[%c128, %c0_88] : memref<256x256xf32, #tpu.memory_space<vmem>>, vector<8x256xf32>
    %156 = arith.mulf %155, %154 : vector<8x256xf32>
    %cst_89 = arith.constant 1.000000e+00 : f32
    %157 = vector.broadcast %cst_89 : f32 to vector<8x256xf32>
    %158 = arith.cmpf oge, %156, %157 : vector<8x256xf32>
    %159 = arith.extui %158 : vector<8x256xi1> to vector<8x256xi32>
    %160 = arith.sitofp %159 : vector<8x256xi32> to vector<8x256xf32>
    %c128_90 = arith.constant 128 : index
    %c0_91 = arith.constant 0 : index
    %161 = vector.load %arg7[%c128_90, %c0_91] : memref<256x256xf32, #tpu.memory_space<vmem>>, vector<8x256xf32>
    tpu.vector_store %arg7[%c128_90, %c0_91], %160 {strides = array<i32>} : memref<256x256xf32, #tpu.memory_space<vmem>>, vector<8x256xf32>,
    %cst_92 = arith.constant 1.000000e+00 : f32
    %162 = vector.broadcast %cst_92 : f32 to vector<8x256xf32>
    %163 = arith.subf %162, %160 : vector<8x256xf32>
    %c136 = arith.constant 136 : index
    %c0_93 = arith.constant 0 : index
    %164 = vector.load %arg7[%c136, %c0_93] : memref<256x256xf32, #tpu.memory_space<vmem>>, vector<8x256xf32>
    %165 = arith.mulf %164, %163 : vector<8x256xf32>
    %cst_94 = arith.constant 1.000000e+00 : f32
    %166 = vector.broadcast %cst_94 : f32 to vector<8x256xf32>
    %167 = arith.cmpf oge, %165, %166 : vector<8x256xf32>
    %168 = arith.extui %167 : vector<8x256xi1> to vector<8x256xi32>
    %169 = arith.sitofp %168 : vector<8x256xi32> to vector<8x256xf32>
    %c136_95 = arith.constant 136 : index
    %c0_96 = arith.constant 0 : index
    %170 = vector.load %arg7[%c136_95, %c0_96] : memref<256x256xf32, #tpu.memory_space<vmem>>, vector<8x256xf32>
    tpu.vector_store %arg7[%c136_95, %c0_96], %169 {strides = array<i32>} : memref<256x256xf32, #tpu.memory_space<vmem>>, vector<8x256xf32>,
    %cst_97 = arith.constant 1.000000e+00 : f32
    %171 = vector.broadcast %cst_97 : f32 to vector<8x256xf32>
    %172 = arith.subf %171, %169 : vector<8x256xf32>
    %c144 = arith.constant 144 : index
    %c0_98 = arith.constant 0 : index
    %173 = vector.load %arg7[%c144, %c0_98] : memref<256x256xf32, #tpu.memory_space<vmem>>, vector<8x256xf32>
    %174 = arith.mulf %173, %172 : vector<8x256xf32>
    %cst_99 = arith.constant 1.000000e+00 : f32
    %175 = vector.broadcast %cst_99 : f32 to vector<8x256xf32>
    %176 = arith.cmpf oge, %174, %175 : vector<8x256xf32>
    %177 = arith.extui %176 : vector<8x256xi1> to vector<8x256xi32>
    %178 = arith.sitofp %177 : vector<8x256xi32> to vector<8x256xf32>
    %c144_100 = arith.constant 144 : index
    %c0_101 = arith.constant 0 : index
    %179 = vector.load %arg7[%c144_100, %c0_101] : memref<256x256xf32, #tpu.memory_space<vmem>>, vector<8x256xf32>
    tpu.vector_store %arg7[%c144_100, %c0_101], %178 {strides = array<i32>} : memref<256x256xf32, #tpu.memory_space<vmem>>, vector<8x256xf32>,
    %cst_102 = arith.constant 1.000000e+00 : f32
    %180 = vector.broadcast %cst_102 : f32 to vector<8x256xf32>
    %181 = arith.subf %180, %178 : vector<8x256xf32>
    %c152 = arith.constant 152 : index
    %c0_103 = arith.constant 0 : index
    %182 = vector.load %arg7[%c152, %c0_103] : memref<256x256xf32, #tpu.memory_space<vmem>>, vector<8x256xf32>
    %183 = arith.mulf %182, %181 : vector<8x256xf32>
    %cst_104 = arith.constant 1.000000e+00 : f32
    %184 = vector.broadcast %cst_104 : f32 to vector<8x256xf32>
    %185 = arith.cmpf oge, %183, %184 : vector<8x256xf32>
    %186 = arith.extui %185 : vector<8x256xi1> to vector<8x256xi32>
    %187 = arith.sitofp %186 : vector<8x256xi32> to vector<8x256xf32>
    %c152_105 = arith.constant 152 : index
    %c0_106 = arith.constant 0 : index
    %188 = vector.load %arg7[%c152_105, %c0_106] : memref<256x256xf32, #tpu.memory_space<vmem>>, vector<8x256xf32>
    tpu.vector_store %arg7[%c152_105, %c0_106], %187 {strides = array<i32>} : memref<256x256xf32, #tpu.memory_space<vmem>>, vector<8x256xf32>,
    %cst_107 = arith.constant 1.000000e+00 : f32
    %189 = vector.broadcast %cst_107 : f32 to vector<8x256xf32>
    %190 = arith.subf %189, %187 : vector<8x256xf32>
    %c160 = arith.constant 160 : index
    %c0_108 = arith.constant 0 : index
    %191 = vector.load %arg7[%c160, %c0_108] : memref<256x256xf32, #tpu.memory_space<vmem>>, vector<8x256xf32>
    %192 = arith.mulf %191, %190 : vector<8x256xf32>
    %cst_109 = arith.constant 1.000000e+00 : f32
    %193 = vector.broadcast %cst_109 : f32 to vector<8x256xf32>
    %194 = arith.cmpf oge, %192, %193 : vector<8x256xf32>
    %195 = arith.extui %194 : vector<8x256xi1> to vector<8x256xi32>
    %196 = arith.sitofp %195 : vector<8x256xi32> to vector<8x256xf32>
    %c160_110 = arith.constant 160 : index
    %c0_111 = arith.constant 0 : index
    %197 = vector.load %arg7[%c160_110, %c0_111] : memref<256x256xf32, #tpu.memory_space<vmem>>, vector<8x256xf32>
    tpu.vector_store %arg7[%c160_110, %c0_111], %196 {strides = array<i32>} : memref<256x256xf32, #tpu.memory_space<vmem>>, vector<8x256xf32>,
    %cst_112 = arith.constant 1.000000e+00 : f32
    %198 = vector.broadcast %cst_112 : f32 to vector<8x256xf32>
    %199 = arith.subf %198, %196 : vector<8x256xf32>
    %c168 = arith.constant 168 : index
    %c0_113 = arith.constant 0 : index
    %200 = vector.load %arg7[%c168, %c0_113] : memref<256x256xf32, #tpu.memory_space<vmem>>, vector<8x256xf32>
    %201 = arith.mulf %200, %199 : vector<8x256xf32>
    %cst_114 = arith.constant 1.000000e+00 : f32
    %202 = vector.broadcast %cst_114 : f32 to vector<8x256xf32>
    %203 = arith.cmpf oge, %201, %202 : vector<8x256xf32>
    %204 = arith.extui %203 : vector<8x256xi1> to vector<8x256xi32>
    %205 = arith.sitofp %204 : vector<8x256xi32> to vector<8x256xf32>
    %c168_115 = arith.constant 168 : index
    %c0_116 = arith.constant 0 : index
    %206 = vector.load %arg7[%c168_115, %c0_116] : memref<256x256xf32, #tpu.memory_space<vmem>>, vector<8x256xf32>
    tpu.vector_store %arg7[%c168_115, %c0_116], %205 {strides = array<i32>} : memref<256x256xf32, #tpu.memory_space<vmem>>, vector<8x256xf32>,
    %cst_117 = arith.constant 1.000000e+00 : f32
    %207 = vector.broadcast %cst_117 : f32 to vector<8x256xf32>
    %208 = arith.subf %207, %205 : vector<8x256xf32>
    %c176 = arith.constant 176 : index
    %c0_118 = arith.constant 0 : index
    %209 = vector.load %arg7[%c176, %c0_118] : memref<256x256xf32, #tpu.memory_space<vmem>>, vector<8x256xf32>
    %210 = arith.mulf %209, %208 : vector<8x256xf32>
    %cst_119 = arith.constant 1.000000e+00 : f32
    %211 = vector.broadcast %cst_119 : f32 to vector<8x256xf32>
    %212 = arith.cmpf oge, %210, %211 : vector<8x256xf32>
    %213 = arith.extui %212 : vector<8x256xi1> to vector<8x256xi32>
    %214 = arith.sitofp %213 : vector<8x256xi32> to vector<8x256xf32>
    %c176_120 = arith.constant 176 : index
    %c0_121 = arith.constant 0 : index
    %215 = vector.load %arg7[%c176_120, %c0_121] : memref<256x256xf32, #tpu.memory_space<vmem>>, vector<8x256xf32>
    tpu.vector_store %arg7[%c176_120, %c0_121], %214 {strides = array<i32>} : memref<256x256xf32, #tpu.memory_space<vmem>>, vector<8x256xf32>,
    %cst_122 = arith.constant 1.000000e+00 : f32
    %216 = vector.broadcast %cst_122 : f32 to vector<8x256xf32>
    %217 = arith.subf %216, %214 : vector<8x256xf32>
    %c184 = arith.constant 184 : index
    %c0_123 = arith.constant 0 : index
    %218 = vector.load %arg7[%c184, %c0_123] : memref<256x256xf32, #tpu.memory_space<vmem>>, vector<8x256xf32>
    %219 = arith.mulf %218, %217 : vector<8x256xf32>
    %cst_124 = arith.constant 1.000000e+00 : f32
    %220 = vector.broadcast %cst_124 : f32 to vector<8x256xf32>
    %221 = arith.cmpf oge, %219, %220 : vector<8x256xf32>
    %222 = arith.extui %221 : vector<8x256xi1> to vector<8x256xi32>
    %223 = arith.sitofp %222 : vector<8x256xi32> to vector<8x256xf32>
    %c184_125 = arith.constant 184 : index
    %c0_126 = arith.constant 0 : index
    %224 = vector.load %arg7[%c184_125, %c0_126] : memref<256x256xf32, #tpu.memory_space<vmem>>, vector<8x256xf32>
    tpu.vector_store %arg7[%c184_125, %c0_126], %223 {strides = array<i32>} : memref<256x256xf32, #tpu.memory_space<vmem>>, vector<8x256xf32>,
    %cst_127 = arith.constant 1.000000e+00 : f32
    %225 = vector.broadcast %cst_127 : f32 to vector<8x256xf32>
    %226 = arith.subf %225, %223 : vector<8x256xf32>
    %c192 = arith.constant 192 : index
    %c0_128 = arith.constant 0 : index
    %227 = vector.load %arg7[%c192, %c0_128] : memref<256x256xf32, #tpu.memory_space<vmem>>, vector<8x256xf32>
    %228 = arith.mulf %227, %226 : vector<8x256xf32>
    %cst_129 = arith.constant 1.000000e+00 : f32
    %229 = vector.broadcast %cst_129 : f32 to vector<8x256xf32>
    %230 = arith.cmpf oge, %228, %229 : vector<8x256xf32>
    %231 = arith.extui %230 : vector<8x256xi1> to vector<8x256xi32>
    %232 = arith.sitofp %231 : vector<8x256xi32> to vector<8x256xf32>
    %c192_130 = arith.constant 192 : index
    %c0_131 = arith.constant 0 : index
    %233 = vector.load %arg7[%c192_130, %c0_131] : memref<256x256xf32, #tpu.memory_space<vmem>>, vector<8x256xf32>
    tpu.vector_store %arg7[%c192_130, %c0_131], %232 {strides = array<i32>} : memref<256x256xf32, #tpu.memory_space<vmem>>, vector<8x256xf32>,
    %cst_132 = arith.constant 1.000000e+00 : f32
    %234 = vector.broadcast %cst_132 : f32 to vector<8x256xf32>
    %235 = arith.subf %234, %232 : vector<8x256xf32>
    %c200 = arith.constant 200 : index
    %c0_133 = arith.constant 0 : index
    %236 = vector.load %arg7[%c200, %c0_133] : memref<256x256xf32, #tpu.memory_space<vmem>>, vector<8x256xf32>
    %237 = arith.mulf %236, %235 : vector<8x256xf32>
    %cst_134 = arith.constant 1.000000e+00 : f32
    %238 = vector.broadcast %cst_134 : f32 to vector<8x256xf32>
    %239 = arith.cmpf oge, %237, %238 : vector<8x256xf32>
    %240 = arith.extui %239 : vector<8x256xi1> to vector<8x256xi32>
    %241 = arith.sitofp %240 : vector<8x256xi32> to vector<8x256xf32>
    %c200_135 = arith.constant 200 : index
    %c0_136 = arith.constant 0 : index
    %242 = vector.load %arg7[%c200_135, %c0_136] : memref<256x256xf32, #tpu.memory_space<vmem>>, vector<8x256xf32>
    tpu.vector_store %arg7[%c200_135, %c0_136], %241 {strides = array<i32>} : memref<256x256xf32, #tpu.memory_space<vmem>>, vector<8x256xf32>,
    %cst_137 = arith.constant 1.000000e+00 : f32
    %243 = vector.broadcast %cst_137 : f32 to vector<8x256xf32>
    %244 = arith.subf %243, %241 : vector<8x256xf32>
    %c208 = arith.constant 208 : index
    %c0_138 = arith.constant 0 : index
    %245 = vector.load %arg7[%c208, %c0_138] : memref<256x256xf32, #tpu.memory_space<vmem>>, vector<8x256xf32>
    %246 = arith.mulf %245, %244 : vector<8x256xf32>
    %cst_139 = arith.constant 1.000000e+00 : f32
    %247 = vector.broadcast %cst_139 : f32 to vector<8x256xf32>
    %248 = arith.cmpf oge, %246, %247 : vector<8x256xf32>
    %249 = arith.extui %248 : vector<8x256xi1> to vector<8x256xi32>
    %250 = arith.sitofp %249 : vector<8x256xi32> to vector<8x256xf32>
    %c208_140 = arith.constant 208 : index
    %c0_141 = arith.constant 0 : index
    %251 = vector.load %arg7[%c208_140, %c0_141] : memref<256x256xf32, #tpu.memory_space<vmem>>, vector<8x256xf32>
    tpu.vector_store %arg7[%c208_140, %c0_141], %250 {strides = array<i32>} : memref<256x256xf32, #tpu.memory_space<vmem>>, vector<8x256xf32>,
    %cst_142 = arith.constant 1.000000e+00 : f32
    %252 = vector.broadcast %cst_142 : f32 to vector<8x256xf32>
    %253 = arith.subf %252, %250 : vector<8x256xf32>
    %c216 = arith.constant 216 : index
    %c0_143 = arith.constant 0 : index
    %254 = vector.load %arg7[%c216, %c0_143] : memref<256x256xf32, #tpu.memory_space<vmem>>, vector<8x256xf32>
    %255 = arith.mulf %254, %253 : vector<8x256xf32>
    %cst_144 = arith.constant 1.000000e+00 : f32
    %256 = vector.broadcast %cst_144 : f32 to vector<8x256xf32>
    %257 = arith.cmpf oge, %255, %256 : vector<8x256xf32>
    %258 = arith.extui %257 : vector<8x256xi1> to vector<8x256xi32>
    %259 = arith.sitofp %258 : vector<8x256xi32> to vector<8x256xf32>
    %c216_145 = arith.constant 216 : index
    %c0_146 = arith.constant 0 : index
    %260 = vector.load %arg7[%c216_145, %c0_146] : memref<256x256xf32, #tpu.memory_space<vmem>>, vector<8x256xf32>
    tpu.vector_store %arg7[%c216_145, %c0_146], %259 {strides = array<i32>} : memref<256x256xf32, #tpu.memory_space<vmem>>, vector<8x256xf32>,
    %cst_147 = arith.constant 1.000000e+00 : f32
    %261 = vector.broadcast %cst_147 : f32 to vector<8x256xf32>
    %262 = arith.subf %261, %259 : vector<8x256xf32>
    %c224 = arith.constant 224 : index
    %c0_148 = arith.constant 0 : index
    %263 = vector.load %arg7[%c224, %c0_148] : memref<256x256xf32, #tpu.memory_space<vmem>>, vector<8x256xf32>
    %264 = arith.mulf %263, %262 : vector<8x256xf32>
    %cst_149 = arith.constant 1.000000e+00 : f32
    %265 = vector.broadcast %cst_149 : f32 to vector<8x256xf32>
    %266 = arith.cmpf oge, %264, %265 : vector<8x256xf32>
    %267 = arith.extui %266 : vector<8x256xi1> to vector<8x256xi32>
    %268 = arith.sitofp %267 : vector<8x256xi32> to vector<8x256xf32>
    %c224_150 = arith.constant 224 : index
    %c0_151 = arith.constant 0 : index
    %269 = vector.load %arg7[%c224_150, %c0_151] : memref<256x256xf32, #tpu.memory_space<vmem>>, vector<8x256xf32>
    tpu.vector_store %arg7[%c224_150, %c0_151], %268 {strides = array<i32>} : memref<256x256xf32, #tpu.memory_space<vmem>>, vector<8x256xf32>,
    %cst_152 = arith.constant 1.000000e+00 : f32
    %270 = vector.broadcast %cst_152 : f32 to vector<8x256xf32>
    %271 = arith.subf %270, %268 : vector<8x256xf32>
    %c232 = arith.constant 232 : index
    %c0_153 = arith.constant 0 : index
    %272 = vector.load %arg7[%c232, %c0_153] : memref<256x256xf32, #tpu.memory_space<vmem>>, vector<8x256xf32>
    %273 = arith.mulf %272, %271 : vector<8x256xf32>
    %cst_154 = arith.constant 1.000000e+00 : f32
    %274 = vector.broadcast %cst_154 : f32 to vector<8x256xf32>
    %275 = arith.cmpf oge, %273, %274 : vector<8x256xf32>
    %276 = arith.extui %275 : vector<8x256xi1> to vector<8x256xi32>
    %277 = arith.sitofp %276 : vector<8x256xi32> to vector<8x256xf32>
    %c232_155 = arith.constant 232 : index
    %c0_156 = arith.constant 0 : index
    %278 = vector.load %arg7[%c232_155, %c0_156] : memref<256x256xf32, #tpu.memory_space<vmem>>, vector<8x256xf32>
    tpu.vector_store %arg7[%c232_155, %c0_156], %277 {strides = array<i32>} : memref<256x256xf32, #tpu.memory_space<vmem>>, vector<8x256xf32>,
    %cst_157 = arith.constant 1.000000e+00 : f32
    %279 = vector.broadcast %cst_157 : f32 to vector<8x256xf32>
    %280 = arith.subf %279, %277 : vector<8x256xf32>
    %c240 = arith.constant 240 : index
    %c0_158 = arith.constant 0 : index
    %281 = vector.load %arg7[%c240, %c0_158] : memref<256x256xf32, #tpu.memory_space<vmem>>, vector<8x256xf32>
    %282 = arith.mulf %281, %280 : vector<8x256xf32>
    %cst_159 = arith.constant 1.000000e+00 : f32
    %283 = vector.broadcast %cst_159 : f32 to vector<8x256xf32>
    %284 = arith.cmpf oge, %282, %283 : vector<8x256xf32>
    %285 = arith.extui %284 : vector<8x256xi1> to vector<8x256xi32>
    %286 = arith.sitofp %285 : vector<8x256xi32> to vector<8x256xf32>
    %c240_160 = arith.constant 240 : index
    %c0_161 = arith.constant 0 : index
    %287 = vector.load %arg7[%c240_160, %c0_161] : memref<256x256xf32, #tpu.memory_space<vmem>>, vector<8x256xf32>
    tpu.vector_store %arg7[%c240_160, %c0_161], %286 {strides = array<i32>} : memref<256x256xf32, #tpu.memory_space<vmem>>, vector<8x256xf32>,
    %cst_162 = arith.constant 1.000000e+00 : f32
    %288 = vector.broadcast %cst_162 : f32 to vector<8x256xf32>
    %289 = arith.subf %288, %286 : vector<8x256xf32>
    %c248 = arith.constant 248 : index
    %c0_163 = arith.constant 0 : index
    %290 = vector.load %arg7[%c248, %c0_163] : memref<256x256xf32, #tpu.memory_space<vmem>>, vector<8x256xf32>
    %291 = arith.mulf %290, %289 : vector<8x256xf32>
    %cst_164 = arith.constant 1.000000e+00 : f32
    %292 = vector.broadcast %cst_164 : f32 to vector<8x256xf32>
    %293 = arith.cmpf oge, %291, %292 : vector<8x256xf32>
    %294 = arith.extui %293 : vector<8x256xi1> to vector<8x256xi32>
    %295 = arith.sitofp %294 : vector<8x256xi32> to vector<8x256xf32>
    %c248_165 = arith.constant 248 : index
    %c0_166 = arith.constant 0 : index
    %296 = vector.load %arg7[%c248_165, %c0_166] : memref<256x256xf32, #tpu.memory_space<vmem>>, vector<8x256xf32>
    tpu.vector_store %arg7[%c248_165, %c0_166], %295 {strides = array<i32>} : memref<256x256xf32, #tpu.memory_space<vmem>>, vector<8x256xf32>,
    %cst_167 = arith.constant 1.000000e+00 : f32
    %297 = vector.broadcast %cst_167 : f32 to vector<8x256xf32>
    %298 = arith.subf %297, %295 : vector<8x256xf32>
    %c0_168 = arith.constant 0 : index
    %c0_169 = arith.constant 0 : index
    %299 = vector.load %arg7[%c0_168, %c0_169] : memref<256x256xf32, #tpu.memory_space<vmem>>, vector<256x256xf32>
    %300 = arith.truncf %299 : vector<256x256xf32> to vector<256x256xbf16>
    %c0_170 = arith.constant 0 : index
    %c0_171 = arith.constant 0 : index
    %301 = vector.load %arg5[%c0_170, %c0_171] : memref<256x256xbf16, #tpu.memory_space<vmem>>, vector<256x256xbf16>
    tpu.vector_store %arg5[%c0_170, %c0_171], %300 {strides = array<i32>} : memref<256x256xbf16, #tpu.memory_space<vmem>>, vector<256x256xbf16>,
    %c0_172 = arith.constant 0 : index
    %c0_173 = arith.constant 0 : index
    %302 = vector.load %arg6[%c0_172, %c0_173] : memref<8x256xf32, #tpu.memory_space<vmem>>, vector<8x256xf32>
    tpu.vector_store %arg6[%c0_172, %c0_173], %298 {strides = array<i32>} : memref<8x256xf32, #tpu.memory_space<vmem>>, vector<8x256xf32>,
    return
  }
  func.func @transform_0(%arg0: i32, %arg1: i32) -> (i32, i32) {
    %c0_i32 = arith.constant 0 : i32
    %c0_i32_0 = arith.constant 0 : i32
    %c0_i32_1 = arith.constant 0 : i32
    return %c0_i32, %c0_i32_0 : i32, i32
  }
  func.func @transform_1(%arg0: i32, %arg1: i32) -> (i32, i32) {
    %c0_i32 = arith.constant 0 : i32
    %c0_i32_0 = arith.constant 0 : i32
    return %c0_i32, %arg0 : i32, i32
  }
  func.func @transform_2(%arg0: i32, %arg1: i32) -> (i32, i32) {
    %c0_i32 = arith.constant 0 : i32
    %c0_i32_0 = arith.constant 0 : i32
    return %c0_i32, %arg0 : i32, i32
  }
  func.func @transform_3(%arg0: i32, %arg1: i32) -> (i32, i32) {
    %c0_i32 = arith.constant 0 : i32
    return %arg1, %arg0 : i32, i32
  }
  func.func @transform_4(%arg0: i32, %arg1: i32) -> (i32, i32) {
    %c0_i32 = arith.constant 0 : i32
    %c0_i32_0 = arith.constant 0 : i32
    return %c0_i32, %arg0 : i32, i32
  }
}

</mosaic_0001>

<llo_original>
// kernel: custom-call
$region0: #{custom-call}
  %s0 = inlined_call_operand.vmem [shape: bf16[64,8,128], index: 0, kind: output, shape index: {}]

// kernel: srm0_linear_forward.1
$region0: #{srm0_linear_forward.1}
  #allocation0 [shape = 'u32[]', space=smem, size = 0x4, offset = 0x4, fixed_abs, tag = 'smem constant byte address 0x4 - core index']
  #allocation1 [shape = 'u32[72,128]{1,0:T(1,128)}', space=vmem, size = 0x9000, scoped, tag = 'internal scratch']
  #allocation2 [shape = 'f32[256,256]{1,0:T(8,128)}', space=vmem, size = 0x40000, scoped, tag = 'scratch operand']
  %s0 = inlined_call_operand.vmem [shape: bf16[512,128], index: 0, kind: input, shape index: {}]
  %s1 = inlined_call_operand.vmem [shape: bf16[128,512], index: 1, kind: input, shape index: {}]
  %s2 = inlined_call_operand.vmem [shape: f32[8,512], index: 2, kind: input, shape index: {}, may-alias: {2,4}]
  %s3 = inlined_call_operand.hbm [shape: bf16[512,512], index: 3, kind: output, shape index: {0}]
  %s4 = inlined_call_operand.vmem [shape: f32[8,512], index: 4, kind: output, shape index: {1}, may-alias: {2,4}]
  %5 = xla_tuple %s3, %s4
  %s6 = sld [smem:[#allocation0]]
  $region95: #{srm0_linear_forward.1} parent=0
    _
  %s8 = ssub.s32 1, %s6
  %s9 = scalar_select 0, %s8, %s6
  $region1: #{srm0_linear_forward.1} parent=0
    #allocation3 [shape = 'u8[65536]{0}', space=vmem, size = 0x10000, scoped, tag = 'input window, operand 1, single buffered']
    #allocation4 [shape = 'u8[262144]{0}', space=vmem, size = 0x40000, scoped, tag = 'output window, operand 0']
    #allocation5 [shape = 's32[2]{0}', space=sflag, size = 0x8, scoped, tag = 'scoped memory for srm0_linear_forward.1']
    %10 = vsyncpa [#allocation5], 0
    %s11 = scalar_lea.sflag [#allocation5], 1
    %12 = vsyncpa %s11, 0
    loop: start=0, step=1, limit=6
    $region2: #{srm0_linear_forward.1} parent=1 // loop_pre_header
      _
    $region3: #{srm0_linear_forward.1} parent=1 // loop_header
      %s14 = sphi 0, %s18
      %p15 = scmp.ge.s32.totalorder %s14, 6
      %s21 = sphi 0, %s33
      %s22 = sphi 0, %s29
      %s23 = sphi 0, %s21
      %s24 = sphi 0, %s22
      %s25 = sphi 0, %s23
      %s26 = sphi 0, %s24
      %s34 = sphi 0, %s34
      %s36 = sphi 0, %s34
      %s37 = sphi 0, %s36
      %s51 = sphi 0, %s37
      %s57 = sphi 0, %s59
      %s60 = sphi 0, %s57
      %s61 = sphi 0, %s60
      %s77 = sphi 0, %s61
      %s83 = sphi 0, %s85
      %s86 = sphi 0, %s83
      %s87 = sphi 0, %s86
      %s103 = sphi 0, %s87
      %s111 = sphi 0, %s113
      %s114 = sphi 0, %s111
      %s115 = sphi 0, %s114
      %s131 = sphi 0, %s115
      %s137 = sphi 0, %s139
      %s140 = sphi 0, %s137
      %s141 = sphi 0, %s140
      %s157 = sphi 0, %s141
    $region4: #{srm0_linear_forward.1} parent=1 // loop_header_branch
      %17 = sbr.rel (%p15) target = $region8
    $region5: #{srm0_linear_forward.1} parent=1 // loop_body
      %s19 = ssub.s32 %s14, 1
      %s20 = ssub.s32 %s14, 2
      %s27 = sadd.s32 1, %s22
      %p28 = scmp.ge.s32.totalorder %s27, 2
      %s29 = scalar_select %p28, 0, %s27
      %s30 = sadd.s32 1, %s21
      %s31 = scalar_select %p28, %s30, %s21
      %p32 = scmp.ge.s32.totalorder %s31, 2
      %s33 = scalar_select %p32, 0, %s31
      %s35 = sadd.s32 %s34, 1
      %p38 = scmp.eq.s32.totalorder %s14, 3
      %p39 = scmp.ne.s32.totalorder %s34, %s36
      %p40 = scmp.eq.s32.totalorder %s14, 0
      %p41 = por %p39, %p40
      %p42 = scmp.ne.s32.totalorder %s34, %s36
      %p43 = scmp.eq.s32.totalorder %s19, 3
      %p44 = por %p42, %p43
      %p45 = scmp.ne.s32.totalorder %s36, %s37
      %p46 = scmp.eq.s32.totalorder %s19, 0
      %p47 = por %p45, %p46
      %p48 = scmp.ne.s32.totalorder %s36, %s37
      %p49 = scmp.eq.s32.totalorder %s20, 3
      %p50 = por %p48, %p49
      %p52 = scmp.ne.s32.totalorder %s37, %s51
      %p53 = scmp.eq.s32.totalorder %s20, 0
      %p54 = por %p52, %p53
      %s55 = ssub.s32 %s21, %s33
      %p56 = scmp.eq.s32.totalorder %s55, 0
      %s58 = sadd.s32 %s57, 1
      %s59 = scalar_select %p56, %s57, %s58
      %p62 = pneg %p56
      %p63 = scmp.eq.s32.totalorder %s14, 3
      %p64 = por %p62, %p63
      %p65 = scmp.ne.s32.totalorder %s57, %s60
      %p66 = scmp.eq.s32.totalorder %s14, 0
      %p67 = por %p65, %p66
      %p68 = scmp.ne.s32.totalorder %s57, %s60
      %p69 = scmp.eq.s32.totalorder %s19, 3
      %p70 = por %p68, %p69
      %p71 = scmp.ne.s32.totalorder %s60, %s61
      %p72 = scmp.eq.s32.totalorder %s19, 0
      %p73 = por %p71, %p72
      %p74 = scmp.ne.s32.totalorder %s60, %s61
      %p75 = scmp.eq.s32.totalorder %s20, 3
      %p76 = por %p74, %p75
      %p78 = scmp.ne.s32.totalorder %s61, %s77
      %p79 = scmp.eq.s32.totalorder %s20, 0
      %p80 = por %p78, %p79
      %s81 = ssub.s32 %s21, %s33
      %p82 = scmp.eq.s32.totalorder %s81, 0
      %s84 = sadd.s32 %s83, 1
      %s85 = scalar_select %p82, %s83, %s84
      %p88 = pneg %p82
      %p89 = scmp.eq.s32.totalorder %s14, 3
      %p90 = por %p88, %p89
      %p91 = scmp.ne.s32.totalorder %s83, %s86
      %p92 = scmp.eq.s32.totalorder %s14, 0
      %p93 = por %p91, %p92
      %p94 = scmp.ne.s32.totalorder %s83, %s86
      %p95 = scmp.eq.s32.totalorder %s19, 3
      %p96 = por %p94, %p95
      %p97 = scmp.ne.s32.totalorder %s86, %s87
      %p98 = scmp.eq.s32.totalorder %s19, 0
      %p99 = por %p97, %p98
      %p100 = scmp.ne.s32.totalorder %s86, %s87
      %p101 = scmp.eq.s32.totalorder %s20, 3
      %p102 = por %p100, %p101
      %p104 = scmp.ne.s32.totalorder %s87, %s103
      %p105 = scmp.eq.s32.totalorder %s20, 0
      %p106 = por %p104, %p105
      %s107 = ssub.s32 %s22, %s29
      %s108 = ssub.s32 %s21, %s33
      %s109 = sor.u32 %s107, %s108
      %p110 = scmp.eq.s32.totalorder %s109, 0
      %s112 = sadd.s32 %s111, 1
      %s113 = scalar_select %p110, %s111, %s112
      %p116 = pneg %p110
      %p117 = scmp.eq.s32.totalorder %s14, 3
      %p118 = por %p116, %p117
      %p119 = scmp.ne.s32.totalorder %s111, %s114
      %p120 = scmp.eq.s32.totalorder %s14, 0
      %p121 = por %p119, %p120
      %p122 = scmp.ne.s32.totalorder %s111, %s114
      %p123 = scmp.eq.s32.totalorder %s19, 3
      %p124 = por %p122, %p123
      %p125 = scmp.ne.s32.totalorder %s114, %s115
      %p126 = scmp.eq.s32.totalorder %s19, 0
      %p127 = por %p125, %p126
      %p128 = scmp.ne.s32.totalorder %s114, %s115
      %p129 = scmp.eq.s32.totalorder %s20, 3
      %p130 = por %p128, %p129
      %p132 = scmp.ne.s32.totalorder %s115, %s131
      %p133 = scmp.eq.s32.totalorder %s20, 0
      %p134 = por %p132, %p133
      %s135 = ssub.s32 %s21, %s33
      %p136 = scmp.eq.s32.totalorder %s135, 0
      %s138 = sadd.s32 %s137, 1
      %s139 = scalar_select %p136, %s137, %s138
      %p142 = pneg %p136
      %p143 = scmp.eq.s32.totalorder %s14, 3
      %p144 = por %p142, %p143
      %p145 = scmp.ne.s32.totalorder %s137, %s140
      %p146 = scmp.eq.s32.totalorder %s14, 0
      %p147 = por %p145, %p146
      %p148 = scmp.ne.s32.totalorder %s137, %s140
      %p149 = scmp.eq.s32.totalorder %s19, 3
      %p150 = por %p148, %p149
      %p151 = scmp.ne.s32.totalorder %s140, %s141
      %p152 = scmp.eq.s32.totalorder %s19, 0
      %p153 = por %p151, %p152
      %p154 = scmp.ne.s32.totalorder %s140, %s141
      %p155 = scmp.eq.s32.totalorder %s20, 3
      %p156 = por %p154, %p155
      %p158 = scmp.ne.s32.totalorder %s141, %s157
      %p159 = scmp.eq.s32.totalorder %s20, 0
      %p160 = por %p158, %p159
      %p161 = scmp.le.s32.totalorder 1, %s14
      %p162 = scmp.lt.s32.totalorder %s14, 5
      %p163 = pnand %p161, %p162
      %p164 = pneg %p163
      // Predicated region
      $region9: #{srm0_linear_forward.1} parent=5 // pred_check
        _
      $region10: #{srm0_linear_forward.1} parent=5 // pred_check_branch
        %166 = sbr.rel (%p163) target = $region12
      $region11: #{srm0_linear_forward.1} parent=5 // pred_region
        %s167 = ssub.s32 %s14, 1
        // Predicated region
        $region13: #{srm0_linear_forward.1} parent=11 // pred_check
          %p168 = pneg %p47
        $region14: #{srm0_linear_forward.1} parent=11 // pred_check_branch
          %170 = sbr.rel (%p168) target = $region16
        $region15: #{srm0_linear_forward.1} parent=11 // pred_region
          _
        $region16: #{srm0_linear_forward.1} parent=11 // pred_fallthru
          _
        // Predicated region
        $region17: #{srm0_linear_forward.1} parent=11 // pred_check
          %p171 = pneg %p73
        $region18: #{srm0_linear_forward.1} parent=11 // pred_check_branch
          %173 = sbr.rel (%p171) target = $region20
        $region19: #{srm0_linear_forward.1} parent=11 // pred_region
          %s174 = smul.u32 2, %s23
          %s175 = smul.addr %s174, 4
          %s176 = scalar_lea.vmem %s1, %s175
          // Predicated region
          $region21: #{srm0_linear_forward.1} parent=19 // pred_check
            _
          $region22: #{srm0_linear_forward.1} parent=19 // pred_check_branch
            %178 = sbr.rel (0) target = $region24
          $region23: #{srm0_linear_forward.1} parent=19 // pred_region
            // Predicated region
            $region25: #{srm0_linear_forward.1} parent=23 // pred_check
              _
            $region26: #{srm0_linear_forward.1} parent=23 // pred_check_branch
              %180 = sbr.rel (0) target = $region28
            $region27: #{srm0_linear_forward.1} parent=23 // pred_region
              // Predicated region
              $region40: #{srm0_linear_forward.1} parent=27 // pred_check
                _
              $region41: #{srm0_linear_forward.1} parent=27 // pred_check_branch
                %226 = sbr.rel (0) target = $region43
              $region42: #{srm0_linear_forward.1} parent=27 // pred_region
                loop: start=0, step=1, limit=1
                $region44: #{srm0_linear_forward.1} parent=42 // loop_pre_header
                  _
                $region45: #{srm0_linear_forward.1} parent=42 // loop_header
                  %s228 = sphi 0, %s232
                  %p229 = scmp.ge.s32.totalorder %s228, 1
                  %s233 = sphi %s176, %s176
                  %s234 = sphi [#allocation3], [#allocation3]
                $region46: #{srm0_linear_forward.1} parent=42 // loop_header_branch
                  %231 = sbr.rel (%p229) target = $region50
                $region47: #{srm0_linear_forward.1} parent=42 // loop_body
                  %v235 = vld [vmem:[%s233] sm:$0xff]
                  %236 = vst [vmem:[%s234] sm:$0xff] %v235
                  %v237 = vld [vmem:[%s233 + $0x10] sm:$0xff]
                  %238 = vst [vmem:[%s234 + $0x8] sm:$0xff] %v237
                  %v239 = vld [vmem:[%s233 + $0x20] sm:$0xff]
                  %240 = vst [vmem:[%s234 + $0x10] sm:$0xff] %v239
                  %v241 = vld [vmem:[%s233 + $0x30] sm:$0xff]
                  %242 = vst [vmem:[%s234 + $0x18] sm:$0xff] %v241
                  %v243 = vld [vmem:[%s233 + $0x40] sm:$0xff]
                  %244 = vst [vmem:[%s234 + $0x20] sm:$0xff] %v243
                  %v245 = vld [vmem:[%s233 + $0x50] sm:$0xff]
                  %246 = vst [vmem:[%s234 + $0x28] sm:$0xff] %v245
                  %v247 = vld [vmem:[%s233 + $0x60] sm:$0xff]
                  %248 = vst [vmem:[%s234 + $0x30] sm:$0xff] %v247
                  %v249 = vld [vmem:[%s233 + $0x70] sm:$0xff]
                  %250 = vst [vmem:[%s234 + $0x38] sm:$0xff] %v249
                  %v251 = vld [vmem:[%s233 + $0x80] sm:$0xff]
                  %252 = vst [vmem:[%s234 + $0x40] sm:$0xff] %v251
                  %v253 = vld [vmem:[%s233 + $0x90] sm:$0xff]
                  %254 = vst [vmem:[%s234 + $0x48] sm:$0xff] %v253
                  %v255 = vld [vmem:[%s233 + $0xa0] sm:$0xff]
                  %256 = vst [vmem:[%s234 + $0x50] sm:$0xff] %v255
                  %v257 = vld [vmem:[%s233 + $0xb0] sm:$0xff]
                  %258 = vst [vmem:[%s234 + $0x58] sm:$0xff] %v257
                  %v259 = vld [vmem:[%s233 + $0xc0] sm:$0xff]
                  %260 = vst [vmem:[%s234 + $0x60] sm:$0xff] %v259
                  %v261 = vld [vmem:[%s233 + $0xd0] sm:$0xff]
                  %262 = vst [vmem:[%s234 + $0x68] sm:$0xff] %v261
                  %v263 = vld [vmem:[%s233 + $0xe0] sm:$0xff]
                  %264 = vst [vmem:[%s234 + $0x70] sm:$0xff] %v263
                  %v265 = vld [vmem:[%s233 + $0xf0] sm:$0xff]
                  %266 = vst [vmem:[%s234 + $0x78] sm:$0xff] %v265
                $region48: #{srm0_linear_forward.1} parent=42 // loop_footer
                  %s232 = sadd.s32 1, %s228
                $region49: #{srm0_linear_forward.1} parent=42 // loop_footer_branch
                  %227 = sbr.rel target = $region45
                $region50: #{srm0_linear_forward.1} parent=42 // loop_exit
                  _
              $region43: #{srm0_linear_forward.1} parent=27 // pred_fallthru
                _
              // Predicated region
              $region51: #{srm0_linear_forward.1} parent=27 // pred_check
                _
              $region52: #{srm0_linear_forward.1} parent=27 // pred_check_branch
                %268 = sbr.rel target = $region54
              $region53: #{srm0_linear_forward.1} parent=27 // pred_region
                _
              $region54: #{srm0_linear_forward.1} parent=27 // pred_fallthru
                _
            $region28: #{srm0_linear_forward.1} parent=23 // pred_fallthru
              _
            // Predicated region
            $region29: #{srm0_linear_forward.1} parent=23 // pred_check
              _
            $region30: #{srm0_linear_forward.1} parent=23 // pred_check_branch
              %182 = sbr.rel target = $region32
            $region31: #{srm0_linear_forward.1} parent=23 // pred_region
              %s184 = ssub.s32 256, 1
              loop: start=0, step=1, limit=1
              $region33: #{srm0_linear_forward.1} parent=31 // loop_pre_header
                _
              $region34: #{srm0_linear_forward.1} parent=31 // loop_header
                %s186 = sphi 0, %s190
                %p187 = scmp.ge.s32.totalorder %s186, 1
                %s191 = sphi %s176, %s176
                %s192 = sphi [#allocation3], [#allocation3]
              $region35: #{srm0_linear_forward.1} parent=31 // loop_header_branch
                %189 = sbr.rel (%p187) target = $region39
              $region36: #{srm0_linear_forward.1} parent=31 // loop_body
                %v193 = vld [vmem:[%s191] sm:%s184]
                %194 = vst [vmem:[%s192] sm:%s184] %v193
                %v195 = vld [vmem:[%s191 + $0x10] sm:%s184]
                %196 = vst [vmem:[%s192 + $0x8] sm:%s184] %v195
                %v197 = vld [vmem:[%s191 + $0x20] sm:%s184]
                %198 = vst [vmem:[%s192 + $0x10] sm:%s184] %v197
                %v199 = vld [vmem:[%s191 + $0x30] sm:%s184]
                %200 = vst [vmem:[%s192 + $0x18] sm:%s184] %v199
                %v201 = vld [vmem:[%s191 + $0x40] sm:%s184]
                %202 = vst [vmem:[%s192 + $0x20] sm:%s184] %v201
                %v203 = vld [vmem:[%s191 + $0x50] sm:%s184]
                %204 = vst [vmem:[%s192 + $0x28] sm:%s184] %v203
                %v205 = vld [vmem:[%s191 + $0x60] sm:%s184]
                %206 = vst [vmem:[%s192 + $0x30] sm:%s184] %v205
                %v207 = vld [vmem:[%s191 + $0x70] sm:%s184]
                %208 = vst [vmem:[%s192 + $0x38] sm:%s184] %v207
                %v209 = vld [vmem:[%s191 + $0x80] sm:%s184]
                %210 = vst [vmem:[%s192 + $0x40] sm:%s184] %v209
                %v211 = vld [vmem:[%s191 + $0x90] sm:%s184]
                %212 = vst [vmem:[%s192 + $0x48] sm:%s184] %v211
                %v213 = vld [vmem:[%s191 + $0xa0] sm:%s184]
                %214 = vst [vmem:[%s192 + $0x50] sm:%s184] %v213
                %v215 = vld [vmem:[%s191 + $0xb0] sm:%s184]
                %216 = vst [vmem:[%s192 + $0x58] sm:%s184] %v215
                %v217 = vld [vmem:[%s191 + $0xc0] sm:%s184]
                %218 = vst [vmem:[%s192 + $0x60] sm:%s184] %v217
                %v219 = vld [vmem:[%s191 + $0xd0] sm:%s184]
                %220 = vst [vmem:[%s192 + $0x68] sm:%s184] %v219
                %v221 = vld [vmem:[%s191 + $0xe0] sm:%s184]
                %222 = vst [vmem:[%s192 + $0x70] sm:%s184] %v221
                %v223 = vld [vmem:[%s191 + $0xf0] sm:%s184]
                %224 = vst [vmem:[%s192 + $0x78] sm:%s184] %v223
              $region37: #{srm0_linear_forward.1} parent=31 // loop_footer
                %s190 = sadd.s32 1, %s186
              $region38: #{srm0_linear_forward.1} parent=31 // loop_footer_branch
                %185 = sbr.rel target = $region34
              $region39: #{srm0_linear_forward.1} parent=31 // loop_exit
                _
            $region32: #{srm0_linear_forward.1} parent=23 // pred_fallthru
              _
          $region24: #{srm0_linear_forward.1} parent=19 // pred_fallthru
            _
          %269 = vnop
        $region20: #{srm0_linear_forward.1} parent=11 // pred_fallthru
          _
      $region12: #{srm0_linear_forward.1} parent=5 // pred_fallthru
        _
      %p270 = scmp.lt.s32.totalorder %s14, 4
      // Predicated region
      $region55: #{srm0_linear_forward.1} parent=5 // pred_check
        %p271 = pneg %p270
      $region56: #{srm0_linear_forward.1} parent=5 // pred_check_branch
        %273 = sbr.rel (%p271) target = $region58
      $region57: #{srm0_linear_forward.1} parent=5 // pred_region
        // Predicated region
        $region59: #{srm0_linear_forward.1} parent=57 // pred_check
          %p274 = pneg %p93
        $region60: #{srm0_linear_forward.1} parent=57 // pred_check_branch
          %276 = sbr.rel (%p274) target = $region62
        $region61: #{srm0_linear_forward.1} parent=57 // pred_region
          %s277 = smul.u32 2, %s21
          %p278 = scmp.lt.s32.totalorder %s277, 3
          %s279 = scalar_select %p278, %s277, 3
          %s280 = smul.addr %s279, 8
          %s281 = scalar_lea.vmem %s2, %s280
          %s282 = smul.u32 2, %s21
        $region62: #{srm0_linear_forward.1} parent=57 // pred_fallthru
          _
      $region58: #{srm0_linear_forward.1} parent=5 // pred_fallthru
        _
      %p283 = scmp.le.s32.totalorder 1, %s14
      %p284 = scmp.lt.s32.totalorder %s14, 5
      %p285 = pnand %p283, %p284
      %p286 = pneg %p285
      // Predicated region
      $region63: #{srm0_linear_forward.1} parent=5 // pred_check
        _
      $region64: #{srm0_linear_forward.1} parent=5 // pred_check_branch
        %288 = sbr.rel (%p285) target = $region66
      $region65: #{srm0_linear_forward.1} parent=5 // pred_region
        %s289 = ssub.s32 %s14, 1
        // Predicated region
        $region67: #{srm0_linear_forward.1} parent=65 // pred_check
          %p290 = pneg %p73
        $region68: #{srm0_linear_forward.1} parent=65 // pred_check_branch
          %292 = sbr.rel (%p290) target = $region70
        $region69: #{srm0_linear_forward.1} parent=65 // pred_region
          _
        $region70: #{srm0_linear_forward.1} parent=65 // pred_fallthru
          _
        %p293 = pneg %p47
        %p294 = pneg %p44
        %p295 = pneg %p73
        %p296 = pneg %p70
        %s297 = smul.u32 2, %s23
        %p298 = scmp.lt.s32.totalorder %s297, 3
        %s299 = scalar_select %p298, %s297, 3
        %s300 = smul.addr %s299, 8
        %s301 = scalar_lea.vmem %s2, %s300
        %p302 = pneg %p99
        %p303 = pneg %p96
        %p304 = pneg %p127
        %p305 = pneg %p124
        %s306 = sand.u32 %s114, 1
        %s307 = scalar_lea.sflag [#allocation5], %s306
        %s308 = sand.u32 %s114, 1
        %s309 = smul.addr %s308, 256
        %s310 = scalar_lea.vmem [#allocation4], %s309
        %p311 = pneg %p153
        %p312 = pneg %p150
        %s313 = smul.u32 2, %s23
        %p314 = scmp.lt.s32.totalorder %s313, 3
        %s315 = scalar_select %p314, %s313, 3
        %s316 = smul.addr %s315, 8
        %s317 = scalar_lea.vmem %s4, %s316
        %s318 = smul.u32 2, %s23
        %s319 = smul.u32 2, %s23
        %p320 = scmp.lt.s32.totalorder %s319, 3
        %s321 = scalar_select %p320, %s319, 3
        %s322 = smul.addr %s321, 8
        %s323 = scalar_lea.vmem %s2, %s322
        %s324 = smul.u32 2, %s23
        %s325 = smul.u32 32, %s24
        %s326 = smul.u32 2, %s23
        %s327 = smul.u32 2, %s23
        %p328 = scmp.lt.s32.totalorder %s327, 3
        %s329 = scalar_select %p328, %s327, 3
        %s330 = smul.addr %s329, 8
        %s331 = scalar_lea.vmem %s4, %s330
        %s332 = smul.u32 2, %s23
        %p333 = scmp.eq.s32.totalorder %s24, 0
        // Predicated region
        $region71: #{srm0_linear_forward.1} parent=65 // pred_check
          %p334 = pneg %p333
        $region72: #{srm0_linear_forward.1} parent=65 // pred_check_branch
          %336 = sbr.rel (%p334) target = $region74
        $region73: #{srm0_linear_forward.1} parent=65 // pred_region
          %v337 = vld [vmem:[%s323] sm:$0xff]
          %v338 = vld [vmem:[%s323 + $0x8] sm:$0xff]
          %339 = vst [vmem:[%s331] sm:$0xff] %v337
          %340 = vst [vmem:[%s331 + $0x8] sm:$0xff] %v338
        $region74: #{srm0_linear_forward.1} parent=65 // pred_fallthru
          _
        %s341 = smul.u32 %s24, 256
        %s342 = sshra.s32 %s341, 3
        %s343 = sand.u32 %s341, 7
        %s344 = smul.addr %s342, 4
        %s345 = scalar_lea.vmem %s0, %s344
        %v346 = vld [vmem:[%s345] sm:$0xf]
        %v347 = vld [vmem:[%s345 + $0x4] sm:$0xf]
        %v348 = vld [vmem:[%s345 + $0x8] sm:$0xf]
        %v349 = vld [vmem:[%s345 + $0xc] sm:$0xf]
        %v350 = vld [vmem:[%s345 + $0x10] sm:$0xf]
        %v351 = vld [vmem:[%s345 + $0x14] sm:$0xf]
        %v352 = vld [vmem:[%s345 + $0x18] sm:$0xf]
        %v353 = vld [vmem:[%s345 + $0x1c] sm:$0xf]
        %v354 = vld [vmem:[%s345 + $0x20] sm:$0xf]
        %v355 = vld [vmem:[%s345 + $0x24] sm:$0xf]
        %v356 = vld [vmem:[%s345 + $0x28] sm:$0xf]
        %v357 = vld [vmem:[%s345 + $0x2c] sm:$0xf]
        %v358 = vld [vmem:[%s345 + $0x30] sm:$0xf]
        %v359 = vld [vmem:[%s345 + $0x34] sm:$0xf]
        %v360 = vld [vmem:[%s345 + $0x38] sm:$0xf]
        %v361 = vld [vmem:[%s345 + $0x3c] sm:$0xf]
        %v362 = vld [vmem:[%s345 + $0x40] sm:$0xf]
        %v363 = vld [vmem:[%s345 + $0x44] sm:$0xf]
        %v364 = vld [vmem:[%s345 + $0x48] sm:$0xf]
        %v365 = vld [vmem:[%s345 + $0x4c] sm:$0xf]
        %v366 = vld [vmem:[%s345 + $0x50] sm:$0xf]
        %v367 = vld [vmem:[%s345 + $0x54] sm:$0xf]
        %v368 = vld [vmem:[%s345 + $0x58] sm:$0xf]
        %v369 = vld [vmem:[%s345 + $0x5c] sm:$0xf]
        %v370 = vld [vmem:[%s345 + $0x60] sm:$0xf]
        %v371 = vld [vmem:[%s345 + $0x64] sm:$0xf]
        %v372 = vld [vmem:[%s345 + $0x68] sm:$0xf]
        %v373 = vld [vmem:[%s345 + $0x6c] sm:$0xf]
        %v374 = vld [vmem:[%s345 + $0x70] sm:$0xf]
        %v375 = vld [vmem:[%s345 + $0x74] sm:$0xf]
        %v376 = vld [vmem:[%s345 + $0x78] sm:$0xf]
        %v377 = vld [vmem:[%s345 + $0x7c] sm:$0xf]
        %v378 = vld [vmem:[#allocation3] sm:$0xff]
        %v379 = vld [vmem:[#allocation3 + $0x8] sm:$0xff]
        %v380 = vld [vmem:[#allocation3 + $0x10] sm:$0xff]
        %v381 = vld [vmem:[#allocation3 + $0x18] sm:$0xff]
        %v382 = vld [vmem:[#allocation3 + $0x20] sm:$0xff]
        %v383 = vld [vmem:[#allocation3 + $0x28] sm:$0xff]
        %v384 = vld [vmem:[#allocation3 + $0x30] sm:$0xff]
        %v385 = vld [vmem:[#allocation3 + $0x38] sm:$0xff]
        %v386 = vld [vmem:[#allocation3 + $0x40] sm:$0xff]
        %v387 = vld [vmem:[#allocation3 + $0x48] sm:$0xff]
        %v388 = vld [vmem:[#allocation3 + $0x50] sm:$0xff]
        %v389 = vld [vmem:[#allocation3 + $0x58] sm:$0xff]
        %v390 = vld [vmem:[#allocation3 + $0x60] sm:$0xff]
        %v391 = vld [vmem:[#allocation3 + $0x68] sm:$0xff]
        %v392 = vld [vmem:[#allocation3 + $0x70] sm:$0xff]
        %v393 = vld [vmem:[#allocation3 + $0x78] sm:$0xff]
        %v426 = vunpack.c.l.b16 %v346
        %v427 = vunpack.c.l.b16 %v347
        %v428 = vunpack.c.l.b16 %v348
        %v429 = vunpack.c.l.b16 %v349
        %v430 = vunpack.c.l.b16 %v350
        %v431 = vunpack.c.l.b16 %v351
        %v432 = vunpack.c.l.b16 %v352
        %v433 = vunpack.c.l.b16 %v353
        %v434 = vunpack.c.l.b16 %v354
        %v435 = vunpack.c.l.b16 %v355
        %v436 = vunpack.c.l.b16 %v356
        %v437 = vunpack.c.l.b16 %v357
        %v438 = vunpack.c.l.b16 %v358
        %v439 = vunpack.c.l.b16 %v359
        %v440 = vunpack.c.l.b16 %v360
        %v441 = vunpack.c.l.b16 %v361
        %v442 = vunpack.c.l.b16 %v362
        %v443 = vunpack.c.l.b16 %v363
        %v444 = vunpack.c.l.b16 %v364
        %v445 = vunpack.c.l.b16 %v365
        %v446 = vunpack.c.l.b16 %v366
        %v447 = vunpack.c.l.b16 %v367
        %v448 = vunpack.c.l.b16 %v368
        %v449 = vunpack.c.l.b16 %v369
        %v450 = vunpack.c.l.b16 %v370
        %v451 = vunpack.c.l.b16 %v371
        %v452 = vunpack.c.l.b16 %v372
        %v453 = vunpack.c.l.b16 %v373
        %v454 = vunpack.c.l.b16 %v374
        %v455 = vunpack.c.l.b16 %v375
        %v456 = vunpack.c.l.b16 %v376
        %v457 = vunpack.c.l.b16 %v377
        %v458 = vpack.c.b16 %v427, %v426
        %v459 = vpack.c.b16 %v429, %v428
        %v460 = vpack.c.b16 %v431, %v430
        %v461 = vpack.c.b16 %v433, %v432
        %v462 = vpack.c.b16 %v435, %v434
        %v463 = vpack.c.b16 %v437, %v436
        %v464 = vpack.c.b16 %v439, %v438
        %v465 = vpack.c.b16 %v441, %v440
        %v466 = vpack.c.b16 %v443, %v442
        %v467 = vpack.c.b16 %v445, %v444
        %v468 = vpack.c.b16 %v447, %v446
        %v469 = vpack.c.b16 %v449, %v448
        %v470 = vpack.c.b16 %v451, %v450
        %v471 = vpack.c.b16 %v453, %v452
        %v472 = vpack.c.b16 %v455, %v454
        %v473 = vpack.c.b16 %v457, %v456
        %v506 = vunpack.c.l.b16 %v378
        %v507 = vunpack.c.h.b16 %v378
        %v508 = vunpack.c.l.b16 %v379
        %v509 = vunpack.c.h.b16 %v379
        %v510 = vunpack.c.l.b16 %v380
        %v511 = vunpack.c.h.b16 %v380
        %v512 = vunpack.c.l.b16 %v381
        %v513 = vunpack.c.h.b16 %v381
        %v514 = vunpack.c.l.b16 %v382
        %v515 = vunpack.c.h.b16 %v382
        %v516 = vunpack.c.l.b16 %v383
        %v517 = vunpack.c.h.b16 %v383
        %v518 = vunpack.c.l.b16 %v384
        %v519 = vunpack.c.h.b16 %v384
        %v520 = vunpack.c.l.b16 %v385
        %v521 = vunpack.c.h.b16 %v385
        %v522 = vunpack.c.l.b16 %v386
        %v523 = vunpack.c.h.b16 %v386
        %v524 = vunpack.c.l.b16 %v387
        %v525 = vunpack.c.h.b16 %v387
        %v526 = vunpack.c.l.b16 %v388
        %v527 = vunpack.c.h.b16 %v388
        %v528 = vunpack.c.l.b16 %v389
        %v529 = vunpack.c.h.b16 %v389
        %v530 = vunpack.c.l.b16 %v390
        %v531 = vunpack.c.h.b16 %v390
        %v532 = vunpack.c.l.b16 %v391
        %v533 = vunpack.c.h.b16 %v391
        %v534 = vunpack.c.l.b16 %v392
        %v535 = vunpack.c.h.b16 %v392
        %v536 = vunpack.c.l.b16 %v393
        %v537 = vunpack.c.h.b16 %v393
        %v538 = vpack.c.b16 %v508, %v506
        %v539 = vpack.c.b16 %v509, %v507
        %v540 = vpack.c.b16 %v512, %v510
        %v541 = vpack.c.b16 %v513, %v511
        %v542 = vpack.c.b16 %v516, %v514
        %v543 = vpack.c.b16 %v517, %v515
        %v544 = vpack.c.b16 %v520, %v518
        %v545 = vpack.c.b16 %v521, %v519
        %v546 = vpack.c.b16 %v524, %v522
        %v547 = vpack.c.b16 %v525, %v523
        %v548 = vpack.c.b16 %v528, %v526
        %v549 = vpack.c.b16 %v529, %v527
        %v550 = vpack.c.b16 %v532, %v530
        %v551 = vpack.c.b16 %v533, %v531
        %v552 = vpack.c.b16 %v536, %v534
        %v553 = vpack.c.b16 %v537, %v535
        %570 = vmatpush.bf16.msra.mxu0 %v552
        %571 = vmatpush.bf16.msra.mxu0 %v550
        %572 = vmatpush.bf16.msra.mxu0 %v548
        %573 = vmatpush.bf16.msra.mxu0 %v546
        %574 = vmatpush.bf16.msra.mxu0 %v544
        %575 = vmatpush.bf16.msra.mxu0 %v542
        %576 = vmatpush.bf16.msra.mxu0 %v540
        %577 = vmatpush.bf16.msra.mxu0 %v538
        %578 = vmatmul.bf16.gmra.mxu0 %v458
        %v579 = vpop.f32.mrf.mxu0
        %v580 = vadd.f32 0.0, %v579
        %v581 = vpop.f32.mrf.mxu0
        %v582 = vadd.f32 0.0, %v581
        %583 = vmatmul.bf16.gmra.mxu0 %v459
        %v584 = vpop.f32.mrf.mxu0
        %v585 = vadd.f32 0.0, %v584
        %v586 = vpop.f32.mrf.mxu0
        %v587 = vadd.f32 0.0, %v586
        %588 = vmatmul.bf16.gmra.mxu0 %v460
        %v589 = vpop.f32.mrf.mxu0
        %v590 = vadd.f32 0.0, %v589
        %v591 = vpop.f32.mrf.mxu0
        %v592 = vadd.f32 0.0, %v591
        %593 = vmatmul.bf16.gmra.mxu0 %v461
        %v594 = vpop.f32.mrf.mxu0
        %v595 = vadd.f32 0.0, %v594
        %v596 = vpop.f32.mrf.mxu0
        %v597 = vadd.f32 0.0, %v596
        %598 = vmatmul.bf16.gmra.mxu0 %v462
        %v599 = vpop.f32.mrf.mxu0
        %v600 = vadd.f32 0.0, %v599
        %v601 = vpop.f32.mrf.mxu0
        %v602 = vadd.f32 0.0, %v601
        %603 = vmatmul.bf16.gmra.mxu0 %v463
        %v604 = vpop.f32.mrf.mxu0
        %v605 = vadd.f32 0.0, %v604
        %v606 = vpop.f32.mrf.mxu0
        %v607 = vadd.f32 0.0, %v606
        %608 = vmatmul.bf16.gmra.mxu0 %v464
        %v609 = vpop.f32.mrf.mxu0
        %v610 = vadd.f32 0.0, %v609
        %v611 = vpop.f32.mrf.mxu0
        %v612 = vadd.f32 0.0, %v611
        %613 = vmatmul.bf16.gmra.mxu0 %v465
        %v614 = vpop.f32.mrf.mxu0
        %v615 = vadd.f32 0.0, %v614
        %v616 = vpop.f32.mrf.mxu0
        %v617 = vadd.f32 0.0, %v616
        %618 = vmatmul.bf16.gmra.mxu0 %v466
        %v619 = vpop.f32.mrf.mxu0
        %v620 = vadd.f32 0.0, %v619
        %v621 = vpop.f32.mrf.mxu0
        %v622 = vadd.f32 0.0, %v621
        %623 = vmatmul.bf16.gmra.mxu0 %v467
        %v624 = vpop.f32.mrf.mxu0
        %v625 = vadd.f32 0.0, %v624
        %v626 = vpop.f32.mrf.mxu0
        %v627 = vadd.f32 0.0, %v626
        %628 = vmatmul.bf16.gmra.mxu0 %v468
        %v629 = vpop.f32.mrf.mxu0
        %v630 = vadd.f32 0.0, %v629
        %v631 = vpop.f32.mrf.mxu0
        %v632 = vadd.f32 0.0, %v631
        %633 = vmatmul.bf16.gmra.mxu0 %v469
        %v634 = vpop.f32.mrf.mxu0
        %v635 = vadd.f32 0.0, %v634
        %v636 = vpop.f32.mrf.mxu0
        %v637 = vadd.f32 0.0, %v636
        %638 = vmatmul.bf16.gmra.mxu0 %v470
        %v639 = vpop.f32.mrf.mxu0
        %v640 = vadd.f32 0.0, %v639
        %v641 = vpop.f32.mrf.mxu0
        %v642 = vadd.f32 0.0, %v641
        %643 = vmatmul.bf16.gmra.mxu0 %v471
        %v644 = vpop.f32.mrf.mxu0
        %v645 = vadd.f32 0.0, %v644
        %v646 = vpop.f32.mrf.mxu0
        %v647 = vadd.f32 0.0, %v646
        %648 = vmatmul.bf16.gmra.mxu0 %v472
        %v649 = vpop.f32.mrf.mxu0
        %v650 = vadd.f32 0.0, %v649
        %v651 = vpop.f32.mrf.mxu0
        %v652 = vadd.f32 0.0, %v651
        %653 = vmatmul.bf16.gmra.mxu0 %v473
        %v654 = vpop.f32.mrf.mxu0
        %v655 = vadd.f32 0.0, %v654
        %v656 = vpop.f32.mrf.mxu0
        %v657 = vadd.f32 0.0, %v656
        %658 = vdwg.mxu0
        %659 = vmatpush.bf16.msra.mxu0 %v553
        %660 = vmatpush.bf16.msra.mxu0 %v551
        %661 = vmatpush.bf16.msra.mxu0 %v549
        %662 = vmatpush.bf16.msra.mxu0 %v547
        %663 = vmatpush.bf16.msra.mxu0 %v545
        %664 = vmatpush.bf16.msra.mxu0 %v543
        %665 = vmatpush.bf16.msra.mxu0 %v541
        %666 = vmatpush.bf16.msra.mxu0 %v539
        %667 = vmatmul.bf16.gmra.mxu0 %v458
        %v668 = vpop.f32.mrf.mxu0
        %v669 = vadd.f32 0.0, %v668
        %v670 = vpop.f32.mrf.mxu0
        %v671 = vadd.f32 0.0, %v670
        %672 = vmatmul.bf16.gmra.mxu0 %v459
        %v673 = vpop.f32.mrf.mxu0
        %v674 = vadd.f32 0.0, %v673
        %v675 = vpop.f32.mrf.mxu0
        %v676 = vadd.f32 0.0, %v675
        %677 = vmatmul.bf16.gmra.mxu0 %v460
        %v678 = vpop.f32.mrf.mxu0
        %v679 = vadd.f32 0.0, %v678
        %v680 = vpop.f32.mrf.mxu0
        %v681 = vadd.f32 0.0, %v680
        %682 = vmatmul.bf16.gmra.mxu0 %v461
        %v683 = vpop.f32.mrf.mxu0
        %v684 = vadd.f32 0.0, %v683
        %v685 = vpop.f32.mrf.mxu0
        %v686 = vadd.f32 0.0, %v685
        %687 = vmatmul.bf16.gmra.mxu0 %v462
        %v688 = vpop.f32.mrf.mxu0
        %v689 = vadd.f32 0.0, %v688
        %v690 = vpop.f32.mrf.mxu0
        %v691 = vadd.f32 0.0, %v690
        %692 = vmatmul.bf16.gmra.mxu0 %v463
        %v693 = vpop.f32.mrf.mxu0
        %v694 = vadd.f32 0.0, %v693
        %v695 = vpop.f32.mrf.mxu0
        %v696 = vadd.f32 0.0, %v695
        %697 = vmatmul.bf16.gmra.mxu0 %v464
        %v698 = vpop.f32.mrf.mxu0
        %v699 = vadd.f32 0.0, %v698
        %v700 = vpop.f32.mrf.mxu0
        %v701 = vadd.f32 0.0, %v700
        %702 = vmatmul.bf16.gmra.mxu0 %v465
        %v703 = vpop.f32.mrf.mxu0
        %v704 = vadd.f32 0.0, %v703
        %v705 = vpop.f32.mrf.mxu0
        %v706 = vadd.f32 0.0, %v705
        %707 = vmatmul.bf16.gmra.mxu0 %v466
        %v708 = vpop.f32.mrf.mxu0
        %v709 = vadd.f32 0.0, %v708
        %v710 = vpop.f32.mrf.mxu0
        %v711 = vadd.f32 0.0, %v710
        %712 = vmatmul.bf16.gmra.mxu0 %v467
        %v713 = vpop.f32.mrf.mxu0
        %v714 = vadd.f32 0.0, %v713
        %v715 = vpop.f32.mrf.mxu0
        %v716 = vadd.f32 0.0, %v715
        %717 = vmatmul.bf16.gmra.mxu0 %v468
        %v718 = vpop.f32.mrf.mxu0
        %v719 = vadd.f32 0.0, %v718
        %v720 = vpop.f32.mrf.mxu0
        %v721 = vadd.f32 0.0, %v720
        %722 = vmatmul.bf16.gmra.mxu0 %v469
        %v723 = vpop.f32.mrf.mxu0
        %v724 = vadd.f32 0.0, %v723
        %v725 = vpop.f32.mrf.mxu0
        %v726 = vadd.f32 0.0, %v725
        %727 = vmatmul.bf16.gmra.mxu0 %v470
        %v728 = vpop.f32.mrf.mxu0
        %v729 = vadd.f32 0.0, %v728
        %v730 = vpop.f32.mrf.mxu0
        %v731 = vadd.f32 0.0, %v730
        %732 = vmatmul.bf16.gmra.mxu0 %v471
        %v733 = vpop.f32.mrf.mxu0
        %v734 = vadd.f32 0.0, %v733
        %v735 = vpop.f32.mrf.mxu0
        %v736 = vadd.f32 0.0, %v735
        %737 = vmatmul.bf16.gmra.mxu0 %v472
        %v738 = vpop.f32.mrf.mxu0
        %v739 = vadd.f32 0.0, %v738
        %v740 = vpop.f32.mrf.mxu0
        %v741 = vadd.f32 0.0, %v740
        %742 = vmatmul.bf16.gmra.mxu0 %v473
        %v743 = vpop.f32.mrf.mxu0
        %v744 = vadd.f32 0.0, %v743
        %v745 = vpop.f32.mrf.mxu0
        %v746 = vadd.f32 0.0, %v745
        %747 = vdwg.mxu0
        %748 = vst [vmem:[#allocation2] sm:$0xff] %v580
        %749 = vst [vmem:[#allocation2 + $0x8] sm:$0xff] %v669
        %750 = vst [vmem:[#allocation2 + $0x10] sm:$0xff] %v582
        %751 = vst [vmem:[#allocation2 + $0x18] sm:$0xff] %v671
        %752 = vst [vmem:[#allocation2 + $0x20] sm:$0xff] %v585
        %753 = vst [vmem:[#allocation2 + $0x28] sm:$0xff] %v674
        %754 = vst [vmem:[#allocation2 + $0x30] sm:$0xff] %v587
        %755 = vst [vmem:[#allocation2 + $0x38] sm:$0xff] %v676
        %756 = vst [vmem:[#allocation2 + $0x40] sm:$0xff] %v590
        %757 = vst [vmem:[#allocation2 + $0x48] sm:$0xff] %v679
        %758 = vst [vmem:[#allocation2 + $0x50] sm:$0xff] %v592
        %759 = vst [vmem:[#allocation2 + $0x58] sm:$0xff] %v681
        %760 = vst [vmem:[#allocation2 + $0x60] sm:$0xff] %v595
        %761 = vst [vmem:[#allocation2 + $0x68] sm:$0xff] %v684
        %762 = vst [vmem:[#allocation2 + $0x70] sm:$0xff] %v597
        %763 = vst [vmem:[#allocation2 + $0x78] sm:$0xff] %v686
        %764 = vst [vmem:[#allocation2 + $0x80] sm:$0xff] %v600
        %765 = vst [vmem:[#allocation2 + $0x88] sm:$0xff] %v689
        %766 = vst [vmem:[#allocation2 + $0x90] sm:$0xff] %v602
        %767 = vst [vmem:[#allocation2 + $0x98] sm:$0xff] %v691
        %768 = vst [vmem:[#allocation2 + $0xa0] sm:$0xff] %v605
        %769 = vst [vmem:[#allocation2 + $0xa8] sm:$0xff] %v694
        %770 = vst [vmem:[#allocation2 + $0xb0] sm:$0xff] %v607
        %771 = vst [vmem:[#allocation2 + $0xb8] sm:$0xff] %v696
        %772 = vst [vmem:[#allocation2 + $0xc0] sm:$0xff] %v610
        %773 = vst [vmem:[#allocation2 + $0xc8] sm:$0xff] %v699
        %774 = vst [vmem:[#allocation2 + $0xd0] sm:$0xff] %v612
        %775 = vst [vmem:[#allocation2 + $0xd8] sm:$0xff] %v701
        %776 = vst [vmem:[#allocation2 + $0xe0] sm:$0xff] %v615
        %777 = vst [vmem:[#allocation2 + $0xe8] sm:$0xff] %v704
        %778 = vst [vmem:[#allocation2 + $0xf0] sm:$0xff] %v617
        %779 = vst [vmem:[#allocation2 + $0xf8] sm:$0xff] %v706
        %780 = vst [vmem:[#allocation2 + $0x100] sm:$0xff] %v620
        %781 = vst [vmem:[#allocation2 + $0x108] sm:$0xff] %v709
        %782 = vst [vmem:[#allocation2 + $0x110] sm:$0xff] %v622
        %783 = vst [vmem:[#allocation2 + $0x118] sm:$0xff] %v711
        %784 = vst [vmem:[#allocation2 + $0x120] sm:$0xff] %v625
        %785 = vst [vmem:[#allocation2 + $0x128] sm:$0xff] %v714
        %786 = vst [vmem:[#allocation2 + $0x130] sm:$0xff] %v627
        %787 = vst [vmem:[#allocation2 + $0x138] sm:$0xff] %v716
        %788 = vst [vmem:[#allocation2 + $0x140] sm:$0xff] %v630
        %789 = vst [vmem:[#allocation2 + $0x148] sm:$0xff] %v719
        %790 = vst [vmem:[#allocation2 + $0x150] sm:$0xff] %v632
        %791 = vst [vmem:[#allocation2 + $0x158] sm:$0xff] %v721
        %792 = vst [vmem:[#allocation2 + $0x160] sm:$0xff] %v635
        %793 = vst [vmem:[#allocation2 + $0x168] sm:$0xff] %v724
        %794 = vst [vmem:[#allocation2 + $0x170] sm:$0xff] %v637
        %795 = vst [vmem:[#allocation2 + $0x178] sm:$0xff] %v726
        %796 = vst [vmem:[#allocation2 + $0x180] sm:$0xff] %v640
        %797 = vst [vmem:[#allocation2 + $0x188] sm:$0xff] %v729
        %798 = vst [vmem:[#allocation2 + $0x190] sm:$0xff] %v642
        %799 = vst [vmem:[#allocation2 + $0x198] sm:$0xff] %v731
        %800 = vst [vmem:[#allocation2 + $0x1a0] sm:$0xff] %v645
        %801 = vst [vmem:[#allocation2 + $0x1a8] sm:$0xff] %v734
        %802 = vst [vmem:[#allocation2 + $0x1b0] sm:$0xff] %v647
        %803 = vst [vmem:[#allocation2 + $0x1b8] sm:$0xff] %v736
        %804 = vst [vmem:[#allocation2 + $0x1c0] sm:$0xff] %v650
        %805 = vst [vmem:[#allocation2 + $0x1c8] sm:$0xff] %v739
        %806 = vst [vmem:[#allocation2 + $0x1d0] sm:$0xff] %v652
        %807 = vst [vmem:[#allocation2 + $0x1d8] sm:$0xff] %v741
        %808 = vst [vmem:[#allocation2 + $0x1e0] sm:$0xff] %v655
        %809 = vst [vmem:[#allocation2 + $0x1e8] sm:$0xff] %v744
        %810 = vst [vmem:[#allocation2 + $0x1f0] sm:$0xff] %v657
        %811 = vst [vmem:[#allocation2 + $0x1f8] sm:$0xff] %v746
        %v812 = vld [vmem:[%s331] sm:$0xff]
        %v813 = vld [vmem:[%s331 + $0x8] sm:$0xff]
        %v814 = vld [vmem:[#allocation2] sm:$0xff]
        %v815 = vld [vmem:[#allocation2 + $0x8] sm:$0xff]
        %v816 = vmul.f32 %v814, %v812
        %v817 = vmul.f32 %v815, %v813
        %vm818 = vcmp.ge.f32.partialorder %v816, 1.0
        %vm819 = vcmp.ge.f32.partialorder %v817, 1.0
        %v820 = vsel %vm818, 1, 0
        %v821 = vsel %vm819, 1, 0
        %v822 = vcvt.s32.f32 %v820
        %v823 = vcvt.s32.f32 %v821
        %824 = vst [vmem:[#allocation2] sm:$0xff] %v822
        %825 = vst [vmem:[#allocation2 + $0x8] sm:$0xff] %v823
        %v826 = vsub.f32 1.0, %v822
        %v827 = vsub.f32 1.0, %v823
        %v828 = vld [vmem:[#allocation2 + $0x10] sm:$0xff]
        %v829 = vld [vmem:[#allocation2 + $0x18] sm:$0xff]
        %v830 = vmul.f32 %v828, %v826
        %v831 = vmul.f32 %v829, %v827
        %vm832 = vcmp.ge.f32.partialorder %v830, 1.0
        %vm833 = vcmp.ge.f32.partialorder %v831, 1.0
        %v834 = vsel %vm832, 1, 0
        %v835 = vsel %vm833, 1, 0
        %v836 = vcvt.s32.f32 %v834
        %v837 = vcvt.s32.f32 %v835
        %838 = vst [vmem:[#allocation2 + $0x10] sm:$0xff] %v836
        %839 = vst [vmem:[#allocation2 + $0x18] sm:$0xff] %v837
        %v840 = vsub.f32 1.0, %v836
        %v841 = vsub.f32 1.0, %v837
        %v842 = vld [vmem:[#allocation2 + $0x20] sm:$0xff]
        %v843 = vld [vmem:[#allocation2 + $0x28] sm:$0xff]
        %v844 = vmul.f32 %v842, %v840
        %v845 = vmul.f32 %v843, %v841
        %vm846 = vcmp.ge.f32.partialorder %v844, 1.0
        %vm847 = vcmp.ge.f32.partialorder %v845, 1.0
        %v848 = vsel %vm846, 1, 0
        %v849 = vsel %vm847, 1, 0
        %v850 = vcvt.s32.f32 %v848
        %v851 = vcvt.s32.f32 %v849
        %852 = vst [vmem:[#allocation2 + $0x20] sm:$0xff] %v850
        %853 = vst [vmem:[#allocation2 + $0x28] sm:$0xff] %v851
        %v854 = vsub.f32 1.0, %v850
        %v855 = vsub.f32 1.0, %v851
        %v856 = vld [vmem:[#allocation2 + $0x30] sm:$0xff]
        %v857 = vld [vmem:[#allocation2 + $0x38] sm:$0xff]
        %v858 = vmul.f32 %v856, %v854
        %v859 = vmul.f32 %v857, %v855
        %vm860 = vcmp.ge.f32.partialorder %v858, 1.0
        %vm861 = vcmp.ge.f32.partialorder %v859, 1.0
        %v862 = vsel %vm860, 1, 0
        %v863 = vsel %vm861, 1, 0
        %v864 = vcvt.s32.f32 %v862
        %v865 = vcvt.s32.f32 %v863
        %866 = vst [vmem:[#allocation2 + $0x30] sm:$0xff] %v864
        %867 = vst [vmem:[#allocation2 + $0x38] sm:$0xff] %v865
        %v868 = vsub.f32 1.0, %v864
        %v869 = vsub.f32 1.0, %v865
        %v870 = vld [vmem:[#allocation2 + $0x40] sm:$0xff]
        %v871 = vld [vmem:[#allocation2 + $0x48] sm:$0xff]
        %v872 = vmul.f32 %v870, %v868
        %v873 = vmul.f32 %v871, %v869
        %vm874 = vcmp.ge.f32.partialorder %v872, 1.0
        %vm875 = vcmp.ge.f32.partialorder %v873, 1.0
        %v876 = vsel %vm874, 1, 0
        %v877 = vsel %vm875, 1, 0
        %v878 = vcvt.s32.f32 %v876
        %v879 = vcvt.s32.f32 %v877
        %880 = vst [vmem:[#allocation2 + $0x40] sm:$0xff] %v878
        %881 = vst [vmem:[#allocation2 + $0x48] sm:$0xff] %v879
        %v882 = vsub.f32 1.0, %v878
        %v883 = vsub.f32 1.0, %v879
        %v884 = vld [vmem:[#allocation2 + $0x50] sm:$0xff]
        %v885 = vld [vmem:[#allocation2 + $0x58] sm:$0xff]
        %v886 = vmul.f32 %v884, %v882
        %v887 = vmul.f32 %v885, %v883
        %vm888 = vcmp.ge.f32.partialorder %v886, 1.0
        %vm889 = vcmp.ge.f32.partialorder %v887, 1.0
        %v890 = vsel %vm888, 1, 0
        %v891 = vsel %vm889, 1, 0
        %v892 = vcvt.s32.f32 %v890
        %v893 = vcvt.s32.f32 %v891
        %894 = vst [vmem:[#allocation2 + $0x50] sm:$0xff] %v892
        %895 = vst [vmem:[#allocation2 + $0x58] sm:$0xff] %v893
        %v896 = vsub.f32 1.0, %v892
        %v897 = vsub.f32 1.0, %v893
        %v898 = vld [vmem:[#allocation2 + $0x60] sm:$0xff]
        %v899 = vld [vmem:[#allocation2 + $0x68] sm:$0xff]
        %v900 = vmul.f32 %v898, %v896
        %v901 = vmul.f32 %v899, %v897
        %vm902 = vcmp.ge.f32.partialorder %v900, 1.0
        %vm903 = vcmp.ge.f32.partialorder %v901, 1.0
        %v904 = vsel %vm902, 1, 0
        %v905 = vsel %vm903, 1, 0
        %v906 = vcvt.s32.f32 %v904
        %v907 = vcvt.s32.f32 %v905
        %908 = vst [vmem:[#allocation2 + $0x60] sm:$0xff] %v906
        %909 = vst [vmem:[#allocation2 + $0x68] sm:$0xff] %v907
        %v910 = vsub.f32 1.0, %v906
        %v911 = vsub.f32 1.0, %v907
        %v912 = vld [vmem:[#allocation2 + $0x70] sm:$0xff]
        %v913 = vld [vmem:[#allocation2 + $0x78] sm:$0xff]
        %v914 = vmul.f32 %v912, %v910
        %v915 = vmul.f32 %v913, %v911
        %vm916 = vcmp.ge.f32.partialorder %v914, 1.0
        %vm917 = vcmp.ge.f32.partialorder %v915, 1.0
        %v918 = vsel %vm916, 1, 0
        %v919 = vsel %vm917, 1, 0
        %v920 = vcvt.s32.f32 %v918
        %v921 = vcvt.s32.f32 %v919
        %922 = vst [vmem:[#allocation2 + $0x70] sm:$0xff] %v920
        %923 = vst [vmem:[#allocation2 + $0x78] sm:$0xff] %v921
        %v924 = vsub.f32 1.0, %v920
        %v925 = vsub.f32 1.0, %v921
        %v926 = vld [vmem:[#allocation2 + $0x80] sm:$0xff]
        %v927 = vld [vmem:[#allocation2 + $0x88] sm:$0xff]
        %v928 = vmul.f32 %v926, %v924
        %v929 = vmul.f32 %v927, %v925
        %vm930 = vcmp.ge.f32.partialorder %v928, 1.0
        %vm931 = vcmp.ge.f32.partialorder %v929, 1.0
        %v932 = vsel %vm930, 1, 0
        %v933 = vsel %vm931, 1, 0
        %v934 = vcvt.s32.f32 %v932
        %v935 = vcvt.s32.f32 %v933
        %936 = vst [vmem:[#allocation2 + $0x80] sm:$0xff] %v934
        %937 = vst [vmem:[#allocation2 + $0x88] sm:$0xff] %v935
        %v938 = vsub.f32 1.0, %v934
        %v939 = vsub.f32 1.0, %v935
        %v940 = vld [vmem:[#allocation2 + $0x90] sm:$0xff]
        %v941 = vld [vmem:[#allocation2 + $0x98] sm:$0xff]
        %v942 = vmul.f32 %v940, %v938
        %v943 = vmul.f32 %v941, %v939
        %vm944 = vcmp.ge.f32.partialorder %v942, 1.0
        %vm945 = vcmp.ge.f32.partialorder %v943, 1.0
        %v946 = vsel %vm944, 1, 0
        %v947 = vsel %vm945, 1, 0
        %v948 = vcvt.s32.f32 %v946
        %v949 = vcvt.s32.f32 %v947
        %950 = vst [vmem:[#allocation2 + $0x90] sm:$0xff] %v948
        %951 = vst [vmem:[#allocation2 + $0x98] sm:$0xff] %v949
        %v952 = vsub.f32 1.0, %v948
        %v953 = vsub.f32 1.0, %v949
        %v954 = vld [vmem:[#allocation2 + $0xa0] sm:$0xff]
        %v955 = vld [vmem:[#allocation2 + $0xa8] sm:$0xff]
        %v956 = vmul.f32 %v954, %v952
        %v957 = vmul.f32 %v955, %v953
        %vm958 = vcmp.ge.f32.partialorder %v956, 1.0
        %vm959 = vcmp.ge.f32.partialorder %v957, 1.0
        %v960 = vsel %vm958, 1, 0
        %v961 = vsel %vm959, 1, 0
        %v962 = vcvt.s32.f32 %v960
        %v963 = vcvt.s32.f32 %v961
        %964 = vst [vmem:[#allocation2 + $0xa0] sm:$0xff] %v962
        %965 = vst [vmem:[#allocation2 + $0xa8] sm:$0xff] %v963
        %v966 = vsub.f32 1.0, %v962
        %v967 = vsub.f32 1.0, %v963
        %v968 = vld [vmem:[#allocation2 + $0xb0] sm:$0xff]
        %v969 = vld [vmem:[#allocation2 + $0xb8] sm:$0xff]
        %v970 = vmul.f32 %v968, %v966
        %v971 = vmul.f32 %v969, %v967
        %vm972 = vcmp.ge.f32.partialorder %v970, 1.0
        %vm973 = vcmp.ge.f32.partialorder %v971, 1.0
        %v974 = vsel %vm972, 1, 0
        %v975 = vsel %vm973, 1, 0
        %v976 = vcvt.s32.f32 %v974
        %v977 = vcvt.s32.f32 %v975
        %978 = vst [vmem:[#allocation2 + $0xb0] sm:$0xff] %v976
        %979 = vst [vmem:[#allocation2 + $0xb8] sm:$0xff] %v977
        %v980 = vsub.f32 1.0, %v976
        %v981 = vsub.f32 1.0, %v977
        %v982 = vld [vmem:[#allocation2 + $0xc0] sm:$0xff]
        %v983 = vld [vmem:[#allocation2 + $0xc8] sm:$0xff]
        %v984 = vmul.f32 %v982, %v980
        %v985 = vmul.f32 %v983, %v981
        %vm986 = vcmp.ge.f32.partialorder %v984, 1.0
        %vm987 = vcmp.ge.f32.partialorder %v985, 1.0
        %v988 = vsel %vm986, 1, 0
        %v989 = vsel %vm987, 1, 0
        %v990 = vcvt.s32.f32 %v988
        %v991 = vcvt.s32.f32 %v989
        %992 = vst [vmem:[#allocation2 + $0xc0] sm:$0xff] %v990
        %993 = vst [vmem:[#allocation2 + $0xc8] sm:$0xff] %v991
        %v994 = vsub.f32 1.0, %v990
        %v995 = vsub.f32 1.0, %v991
        %v996 = vld [vmem:[#allocation2 + $0xd0] sm:$0xff]
        %v997 = vld [vmem:[#allocation2 + $0xd8] sm:$0xff]
        %v998 = vmul.f32 %v996, %v994
        %v999 = vmul.f32 %v997, %v995
        %vm1000 = vcmp.ge.f32.partialorder %v998, 1.0
        %vm1001 = vcmp.ge.f32.partialorder %v999, 1.0
        %v1002 = vsel %vm1000, 1, 0
        %v1003 = vsel %vm1001, 1, 0
        %v1004 = vcvt.s32.f32 %v1002
        %v1005 = vcvt.s32.f32 %v1003
        %1006 = vst [vmem:[#allocation2 + $0xd0] sm:$0xff] %v1004
        %1007 = vst [vmem:[#allocation2 + $0xd8] sm:$0xff] %v1005
        %v1008 = vsub.f32 1.0, %v1004
        %v1009 = vsub.f32 1.0, %v1005
        %v1010 = vld [vmem:[#allocation2 + $0xe0] sm:$0xff]
        %v1011 = vld [vmem:[#allocation2 + $0xe8] sm:$0xff]
        %v1012 = vmul.f32 %v1010, %v1008
        %v1013 = vmul.f32 %v1011, %v1009
        %vm1014 = vcmp.ge.f32.partialorder %v1012, 1.0
        %vm1015 = vcmp.ge.f32.partialorder %v1013, 1.0
        %v1016 = vsel %vm1014, 1, 0
        %v1017 = vsel %vm1015, 1, 0
        %v1018 = vcvt.s32.f32 %v1016
        %v1019 = vcvt.s32.f32 %v1017
        %1020 = vst [vmem:[#allocation2 + $0xe0] sm:$0xff] %v1018
        %1021 = vst [vmem:[#allocation2 + $0xe8] sm:$0xff] %v1019
        %v1022 = vsub.f32 1.0, %v1018
        %v1023 = vsub.f32 1.0, %v1019
        %v1024 = vld [vmem:[#allocation2 + $0xf0] sm:$0xff]
        %v1025 = vld [vmem:[#allocation2 + $0xf8] sm:$0xff]
        %v1026 = vmul.f32 %v1024, %v1022
        %v1027 = vmul.f32 %v1025, %v1023
        %vm1028 = vcmp.ge.f32.partialorder %v1026, 1.0
        %vm1029 = vcmp.ge.f32.partialorder %v1027, 1.0
        %v1030 = vsel %vm1028, 1, 0
        %v1031 = vsel %vm1029, 1, 0
        %v1032 = vcvt.s32.f32 %v1030
        %v1033 = vcvt.s32.f32 %v1031
        %1034 = vst [vmem:[#allocation2 + $0xf0] sm:$0xff] %v1032
        %1035 = vst [vmem:[#allocation2 + $0xf8] sm:$0xff] %v1033
        %v1036 = vsub.f32 1.0, %v1032
        %v1037 = vsub.f32 1.0, %v1033
        %v1038 = vld [vmem:[#allocation2 + $0x100] sm:$0xff]
        %v1039 = vld [vmem:[#allocation2 + $0x108] sm:$0xff]
        %v1040 = vmul.f32 %v1038, %v1036
        %v1041 = vmul.f32 %v1039, %v1037
        %vm1042 = vcmp.ge.f32.partialorder %v1040, 1.0
        %vm1043 = vcmp.ge.f32.partialorder %v1041, 1.0
        %v1044 = vsel %vm1042, 1, 0
        %v1045 = vsel %vm1043, 1, 0
        %v1046 = vcvt.s32.f32 %v1044
        %v1047 = vcvt.s32.f32 %v1045
        %1048 = vst [vmem:[#allocation2 + $0x100] sm:$0xff] %v1046
        %1049 = vst [vmem:[#allocation2 + $0x108] sm:$0xff] %v1047
        %v1050 = vsub.f32 1.0, %v1046
        %v1051 = vsub.f32 1.0, %v1047
        %v1052 = vld [vmem:[#allocation2 + $0x110] sm:$0xff]
        %v1053 = vld [vmem:[#allocation2 + $0x118] sm:$0xff]
        %v1054 = vmul.f32 %v1052, %v1050
        %v1055 = vmul.f32 %v1053, %v1051
        %vm1056 = vcmp.ge.f32.partialorder %v1054, 1.0
        %vm1057 = vcmp.ge.f32.partialorder %v1055, 1.0
        %v1058 = vsel %vm1056, 1, 0
        %v1059 = vsel %vm1057, 1, 0
        %v1060 = vcvt.s32.f32 %v1058
        %v1061 = vcvt.s32.f32 %v1059
        %1062 = vst [vmem:[#allocation2 + $0x110] sm:$0xff] %v1060
        %1063 = vst [vmem:[#allocation2 + $0x118] sm:$0xff] %v1061
        %v1064 = vsub.f32 1.0, %v1060
        %v1065 = vsub.f32 1.0, %v1061
        %v1066 = vld [vmem:[#allocation2 + $0x120] sm:$0xff]
        %v1067 = vld [vmem:[#allocation2 + $0x128] sm:$0xff]
        %v1068 = vmul.f32 %v1066, %v1064
        %v1069 = vmul.f32 %v1067, %v1065
        %vm1070 = vcmp.ge.f32.partialorder %v1068, 1.0
        %vm1071 = vcmp.ge.f32.partialorder %v1069, 1.0
        %v1072 = vsel %vm1070, 1, 0
        %v1073 = vsel %vm1071, 1, 0
        %v1074 = vcvt.s32.f32 %v1072
        %v1075 = vcvt.s32.f32 %v1073
        %1076 = vst [vmem:[#allocation2 + $0x120] sm:$0xff] %v1074
        %1077 = vst [vmem:[#allocation2 + $0x128] sm:$0xff] %v1075
        %v1078 = vsub.f32 1.0, %v1074
        %v1079 = vsub.f32 1.0, %v1075
        %v1080 = vld [vmem:[#allocation2 + $0x130] sm:$0xff]
        %v1081 = vld [vmem:[#allocation2 + $0x138] sm:$0xff]
        %v1082 = vmul.f32 %v1080, %v1078
        %v1083 = vmul.f32 %v1081, %v1079
        %vm1084 = vcmp.ge.f32.partialorder %v1082, 1.0
        %vm1085 = vcmp.ge.f32.partialorder %v1083, 1.0
        %v1086 = vsel %vm1084, 1, 0
        %v1087 = vsel %vm1085, 1, 0
        %v1088 = vcvt.s32.f32 %v1086
        %v1089 = vcvt.s32.f32 %v1087
        %1090 = vst [vmem:[#allocation2 + $0x130] sm:$0xff] %v1088
        %1091 = vst [vmem:[#allocation2 + $0x138] sm:$0xff] %v1089
        %v1092 = vsub.f32 1.0, %v1088
        %v1093 = vsub.f32 1.0, %v1089
        %v1094 = vld [vmem:[#allocation2 + $0x140] sm:$0xff]
        %v1095 = vld [vmem:[#allocation2 + $0x148] sm:$0xff]
        %v1096 = vmul.f32 %v1094, %v1092
        %v1097 = vmul.f32 %v1095, %v1093
        %vm1098 = vcmp.ge.f32.partialorder %v1096, 1.0
        %vm1099 = vcmp.ge.f32.partialorder %v1097, 1.0
        %v1100 = vsel %vm1098, 1, 0
        %v1101 = vsel %vm1099, 1, 0
        %v1102 = vcvt.s32.f32 %v1100
        %v1103 = vcvt.s32.f32 %v1101
        %1104 = vst [vmem:[#allocation2 + $0x140] sm:$0xff] %v1102
        %1105 = vst [vmem:[#allocation2 + $0x148] sm:$0xff] %v1103
        %v1106 = vsub.f32 1.0, %v1102
        %v1107 = vsub.f32 1.0, %v1103
        %v1108 = vld [vmem:[#allocation2 + $0x150] sm:$0xff]
        %v1109 = vld [vmem:[#allocation2 + $0x158] sm:$0xff]
        %v1110 = vmul.f32 %v1108, %v1106
        %v1111 = vmul.f32 %v1109, %v1107
        %vm1112 = vcmp.ge.f32.partialorder %v1110, 1.0
        %vm1113 = vcmp.ge.f32.partialorder %v1111, 1.0
        %v1114 = vsel %vm1112, 1, 0
        %v1115 = vsel %vm1113, 1, 0
        %v1116 = vcvt.s32.f32 %v1114
        %v1117 = vcvt.s32.f32 %v1115
        %1118 = vst [vmem:[#allocation2 + $0x150] sm:$0xff] %v1116
        %1119 = vst [vmem:[#allocation2 + $0x158] sm:$0xff] %v1117
        %v1120 = vsub.f32 1.0, %v1116
        %v1121 = vsub.f32 1.0, %v1117
        %v1122 = vld [vmem:[#allocation2 + $0x160] sm:$0xff]
        %v1123 = vld [vmem:[#allocation2 + $0x168] sm:$0xff]
        %v1124 = vmul.f32 %v1122, %v1120
        %v1125 = vmul.f32 %v1123, %v1121
        %vm1126 = vcmp.ge.f32.partialorder %v1124, 1.0
        %vm1127 = vcmp.ge.f32.partialorder %v1125, 1.0
        %v1128 = vsel %vm1126, 1, 0
        %v1129 = vsel %vm1127, 1, 0
        %v1130 = vcvt.s32.f32 %v1128
        %v1131 = vcvt.s32.f32 %v1129
        %1132 = vst [vmem:[#allocation2 + $0x160] sm:$0xff] %v1130
        %1133 = vst [vmem:[#allocation2 + $0x168] sm:$0xff] %v1131
        %v1134 = vsub.f32 1.0, %v1130
        %v1135 = vsub.f32 1.0, %v1131
        %v1136 = vld [vmem:[#allocation2 + $0x170] sm:$0xff]
        %v1137 = vld [vmem:[#allocation2 + $0x178] sm:$0xff]
        %v1138 = vmul.f32 %v1136, %v1134
        %v1139 = vmul.f32 %v1137, %v1135
        %vm1140 = vcmp.ge.f32.partialorder %v1138, 1.0
        %vm1141 = vcmp.ge.f32.partialorder %v1139, 1.0
        %v1142 = vsel %vm1140, 1, 0
        %v1143 = vsel %vm1141, 1, 0
        %v1144 = vcvt.s32.f32 %v1142
        %v1145 = vcvt.s32.f32 %v1143
        %1146 = vst [vmem:[#allocation2 + $0x170] sm:$0xff] %v1144
        %1147 = vst [vmem:[#allocation2 + $0x178] sm:$0xff] %v1145
        %v1148 = vsub.f32 1.0, %v1144
        %v1149 = vsub.f32 1.0, %v1145
        %v1150 = vld [vmem:[#allocation2 + $0x180] sm:$0xff]
        %v1151 = vld [vmem:[#allocation2 + $0x188] sm:$0xff]
        %v1152 = vmul.f32 %v1150, %v1148
        %v1153 = vmul.f32 %v1151, %v1149
        %vm1154 = vcmp.ge.f32.partialorder %v1152, 1.0
        %vm1155 = vcmp.ge.f32.partialorder %v1153, 1.0
        %v1156 = vsel %vm1154, 1, 0
        %v1157 = vsel %vm1155, 1, 0
        %v1158 = vcvt.s32.f32 %v1156
        %v1159 = vcvt.s32.f32 %v1157
        %1160 = vst [vmem:[#allocation2 + $0x180] sm:$0xff] %v1158
        %1161 = vst [vmem:[#allocation2 + $0x188] sm:$0xff] %v1159
        %v1162 = vsub.f32 1.0, %v1158
        %v1163 = vsub.f32 1.0, %v1159
        %v1164 = vld [vmem:[#allocation2 + $0x190] sm:$0xff]
        %v1165 = vld [vmem:[#allocation2 + $0x198] sm:$0xff]
        %v1166 = vmul.f32 %v1164, %v1162
        %v1167 = vmul.f32 %v1165, %v1163
        %vm1168 = vcmp.ge.f32.partialorder %v1166, 1.0
        %vm1169 = vcmp.ge.f32.partialorder %v1167, 1.0
        %v1170 = vsel %vm1168, 1, 0
        %v1171 = vsel %vm1169, 1, 0
        %v1172 = vcvt.s32.f32 %v1170
        %v1173 = vcvt.s32.f32 %v1171
        %1174 = vst [vmem:[#allocation2 + $0x190] sm:$0xff] %v1172
        %1175 = vst [vmem:[#allocation2 + $0x198] sm:$0xff] %v1173
        %v1176 = vsub.f32 1.0, %v1172
        %v1177 = vsub.f32 1.0, %v1173
        %v1178 = vld [vmem:[#allocation2 + $0x1a0] sm:$0xff]
        %v1179 = vld [vmem:[#allocation2 + $0x1a8] sm:$0xff]
        %v1180 = vmul.f32 %v1178, %v1176
        %v1181 = vmul.f32 %v1179, %v1177
        %vm1182 = vcmp.ge.f32.partialorder %v1180, 1.0
        %vm1183 = vcmp.ge.f32.partialorder %v1181, 1.0
        %v1184 = vsel %vm1182, 1, 0
        %v1185 = vsel %vm1183, 1, 0
        %v1186 = vcvt.s32.f32 %v1184
        %v1187 = vcvt.s32.f32 %v1185
        %1188 = vst [vmem:[#allocation2 + $0x1a0] sm:$0xff] %v1186
        %1189 = vst [vmem:[#allocation2 + $0x1a8] sm:$0xff] %v1187
        %v1190 = vsub.f32 1.0, %v1186
        %v1191 = vsub.f32 1.0, %v1187
        %v1192 = vld [vmem:[#allocation2 + $0x1b0] sm:$0xff]
        %v1193 = vld [vmem:[#allocation2 + $0x1b8] sm:$0xff]
        %v1194 = vmul.f32 %v1192, %v1190
        %v1195 = vmul.f32 %v1193, %v1191
        %vm1196 = vcmp.ge.f32.partialorder %v1194, 1.0
        %vm1197 = vcmp.ge.f32.partialorder %v1195, 1.0
        %v1198 = vsel %vm1196, 1, 0
        %v1199 = vsel %vm1197, 1, 0
        %v1200 = vcvt.s32.f32 %v1198
        %v1201 = vcvt.s32.f32 %v1199
        %1202 = vst [vmem:[#allocation2 + $0x1b0] sm:$0xff] %v1200
        %1203 = vst [vmem:[#allocation2 + $0x1b8] sm:$0xff] %v1201
        %v1204 = vsub.f32 1.0, %v1200
        %v1205 = vsub.f32 1.0, %v1201
        %v1206 = vld [vmem:[#allocation2 + $0x1c0] sm:$0xff]
        %v1207 = vld [vmem:[#allocation2 + $0x1c8] sm:$0xff]
        %v1208 = vmul.f32 %v1206, %v1204
        %v1209 = vmul.f32 %v1207, %v1205
        %vm1210 = vcmp.ge.f32.partialorder %v1208, 1.0
        %vm1211 = vcmp.ge.f32.partialorder %v1209, 1.0
        %v1212 = vsel %vm1210, 1, 0
        %v1213 = vsel %vm1211, 1, 0
        %v1214 = vcvt.s32.f32 %v1212
        %v1215 = vcvt.s32.f32 %v1213
        %1216 = vst [vmem:[#allocation2 + $0x1c0] sm:$0xff] %v1214
        %1217 = vst [vmem:[#allocation2 + $0x1c8] sm:$0xff] %v1215
        %v1218 = vsub.f32 1.0, %v1214
        %v1219 = vsub.f32 1.0, %v1215
        %v1220 = vld [vmem:[#allocation2 + $0x1d0] sm:$0xff]
        %v1221 = vld [vmem:[#allocation2 + $0x1d8] sm:$0xff]
        %v1222 = vmul.f32 %v1220, %v1218
        %v1223 = vmul.f32 %v1221, %v1219
        %vm1224 = vcmp.ge.f32.partialorder %v1222, 1.0
        %vm1225 = vcmp.ge.f32.partialorder %v1223, 1.0
        %v1226 = vsel %vm1224, 1, 0
        %v1227 = vsel %vm1225, 1, 0
        %v1228 = vcvt.s32.f32 %v1226
        %v1229 = vcvt.s32.f32 %v1227
        %1230 = vst [vmem:[#allocation2 + $0x1d0] sm:$0xff] %v1228
        %1231 = vst [vmem:[#allocation2 + $0x1d8] sm:$0xff] %v1229
        %v1232 = vsub.f32 1.0, %v1228
        %v1233 = vsub.f32 1.0, %v1229
        %v1234 = vld [vmem:[#allocation2 + $0x1e0] sm:$0xff]
        %v1235 = vld [vmem:[#allocation2 + $0x1e8] sm:$0xff]
        %v1236 = vmul.f32 %v1234, %v1232
        %v1237 = vmul.f32 %v1235, %v1233
        %vm1238 = vcmp.ge.f32.partialorder %v1236, 1.0
        %vm1239 = vcmp.ge.f32.partialorder %v1237, 1.0
        %v1240 = vsel %vm1238, 1, 0
        %v1241 = vsel %vm1239, 1, 0
        %v1242 = vcvt.s32.f32 %v1240
        %v1243 = vcvt.s32.f32 %v1241
        %1244 = vst [vmem:[#allocation2 + $0x1e0] sm:$0xff] %v1242
        %1245 = vst [vmem:[#allocation2 + $0x1e8] sm:$0xff] %v1243
        %v1246 = vsub.f32 1.0, %v1242
        %v1247 = vsub.f32 1.0, %v1243
        %v1248 = vld [vmem:[#allocation2 + $0x1f0] sm:$0xff]
        %v1249 = vld [vmem:[#allocation2 + $0x1f8] sm:$0xff]
        %v1250 = vmul.f32 %v1248, %v1246
        %v1251 = vmul.f32 %v1249, %v1247
        %vm1252 = vcmp.ge.f32.partialorder %v1250, 1.0
        %vm1253 = vcmp.ge.f32.partialorder %v1251, 1.0
        %v1254 = vsel %vm1252, 1, 0
        %v1255 = vsel %vm1253, 1, 0
        %v1256 = vcvt.s32.f32 %v1254
        %v1257 = vcvt.s32.f32 %v1255
        %1258 = vst [vmem:[#allocation2 + $0x1f0] sm:$0xff] %v1256
        %1259 = vst [vmem:[#allocation2 + $0x1f8] sm:$0xff] %v1257
        %v1260 = vsub.f32 1.0, %v1256
        %v1261 = vsub.f32 1.0, %v1257
        %v1262 = vld [vmem:[#allocation2] sm:$0xff]
        %v1263 = vld [vmem:[#allocation2 + $0x8] sm:$0xff]
        %v1264 = vld [vmem:[#allocation2 + $0x10] sm:$0xff]
        %v1265 = vld [vmem:[#allocation2 + $0x18] sm:$0xff]
        %v1266 = vld [vmem:[#allocation2 + $0x20] sm:$0xff]
        %v1267 = vld [vmem:[#allocation2 + $0x28] sm:$0xff]
        %v1268 = vld [vmem:[#allocation2 + $0x30] sm:$0xff]
        %v1269 = vld [vmem:[#allocation2 + $0x38] sm:$0xff]
        %v1270 = vld [vmem:[#allocation2 + $0x40] sm:$0xff]
        %v1271 = vld [vmem:[#allocation2 + $0x48] sm:$0xff]
        %v1272 = vld [vmem:[#allocation2 + $0x50] sm:$0xff]
        %v1273 = vld [vmem:[#allocation2 + $0x58] sm:$0xff]
        %v1274 = vld [vmem:[#allocation2 + $0x60] sm:$0xff]
        %v1275 = vld [vmem:[#allocation2 + $0x68] sm:$0xff]
        %v1276 = vld [vmem:[#allocation2 + $0x70] sm:$0xff]
        %v1277 = vld [vmem:[#allocation2 + $0x78] sm:$0xff]
        %v1278 = vld [vmem:[#allocation2 + $0x80] sm:$0xff]
        %v1279 = vld [vmem:[#allocation2 + $0x88] sm:$0xff]
        %v1280 = vld [vmem:[#allocation2 + $0x90] sm:$0xff]
        %v1281 = vld [vmem:[#allocation2 + $0x98] sm:$0xff]
        %v1282 = vld [vmem:[#allocation2 + $0xa0] sm:$0xff]
        %v1283 = vld [vmem:[#allocation2 + $0xa8] sm:$0xff]
        %v1284 = vld [vmem:[#allocation2 + $0xb0] sm:$0xff]
        %v1285 = vld [vmem:[#allocation2 + $0xb8] sm:$0xff]
        %v1286 = vld [vmem:[#allocation2 + $0xc0] sm:$0xff]
        %v1287 = vld [vmem:[#allocation2 + $0xc8] sm:$0xff]
        %v1288 = vld [vmem:[#allocation2 + $0xd0] sm:$0xff]
        %v1289 = vld [vmem:[#allocation2 + $0xd8] sm:$0xff]
        %v1290 = vld [vmem:[#allocation2 + $0xe0] sm:$0xff]
        %v1291 = vld [vmem:[#allocation2 + $0xe8] sm:$0xff]
        %v1292 = vld [vmem:[#allocation2 + $0xf0] sm:$0xff]
        %v1293 = vld [vmem:[#allocation2 + $0xf8] sm:$0xff]
        %v1294 = vld [vmem:[#allocation2 + $0x100] sm:$0xff]
        %v1295 = vld [vmem:[#allocation2 + $0x108] sm:$0xff]
        %v1296 = vld [vmem:[#allocation2 + $0x110] sm:$0xff]
        %v1297 = vld [vmem:[#allocation2 + $0x118] sm:$0xff]
        %v1298 = vld [vmem:[#allocation2 + $0x120] sm:$0xff]
        %v1299 = vld [vmem:[#allocation2 + $0x128] sm:$0xff]
        %v1300 = vld [vmem:[#allocation2 + $0x130] sm:$0xff]
        %v1301 = vld [vmem:[#allocation2 + $0x138] sm:$0xff]
        %v1302 = vld [vmem:[#allocation2 + $0x140] sm:$0xff]
        %v1303 = vld [vmem:[#allocation2 + $0x148] sm:$0xff]
        %v1304 = vld [vmem:[#allocation2 + $0x150] sm:$0xff]
        %v1305 = vld [vmem:[#allocation2 + $0x158] sm:$0xff]
        %v1306 = vld [vmem:[#allocation2 + $0x160] sm:$0xff]
        %v1307 = vld [vmem:[#allocation2 + $0x168] sm:$0xff]
        %v1308 = vld [vmem:[#allocation2 + $0x170] sm:$0xff]
        %v1309 = vld [vmem:[#allocation2 + $0x178] sm:$0xff]
        %v1310 = vld [vmem:[#allocation2 + $0x180] sm:$0xff]
        %v1311 = vld [vmem:[#allocation2 + $0x188] sm:$0xff]
        %v1312 = vld [vmem:[#allocation2 + $0x190] sm:$0xff]
        %v1313 = vld [vmem:[#allocation2 + $0x198] sm:$0xff]
        %v1314 = vld [vmem:[#allocation2 + $0x1a0] sm:$0xff]
        %v1315 = vld [vmem:[#allocation2 + $0x1a8] sm:$0xff]
        %v1316 = vld [vmem:[#allocation2 + $0x1b0] sm:$0xff]
        %v1317 = vld [vmem:[#allocation2 + $0x1b8] sm:$0xff]
        %v1318 = vld [vmem:[#allocation2 + $0x1c0] sm:$0xff]
        %v1319 = vld [vmem:[#allocation2 + $0x1c8] sm:$0xff]
        %v1320 = vld [vmem:[#allocation2 + $0x1d0] sm:$0xff]
        %v1321 = vld [vmem:[#allocation2 + $0x1d8] sm:$0xff]
        %v1322 = vld [vmem:[#allocation2 + $0x1e0] sm:$0xff]
        %v1323 = vld [vmem:[#allocation2 + $0x1e8] sm:$0xff]
        %v1324 = vld [vmem:[#allocation2 + $0x1f0] sm:$0xff]
        %v1325 = vld [vmem:[#allocation2 + $0x1f8] sm:$0xff]
        %v1326 = vpack.c.bf16 %v1263, %v1262
        %v1327 = vpack.c.bf16 %v1265, %v1264
        %v1328 = vpack.c.bf16 %v1267, %v1266
        %v1329 = vpack.c.bf16 %v1269, %v1268
        %v1330 = vpack.c.bf16 %v1271, %v1270
        %v1331 = vpack.c.bf16 %v1273, %v1272
        %v1332 = vpack.c.bf16 %v1275, %v1274
        %v1333 = vpack.c.bf16 %v1277, %v1276
        %v1334 = vpack.c.bf16 %v1279, %v1278
        %v1335 = vpack.c.bf16 %v1281, %v1280
        %v1336 = vpack.c.bf16 %v1283, %v1282
        %v1337 = vpack.c.bf16 %v1285, %v1284
        %v1338 = vpack.c.bf16 %v1287, %v1286
        %v1339 = vpack.c.bf16 %v1289, %v1288
        %v1340 = vpack.c.bf16 %v1291, %v1290
        %v1341 = vpack.c.bf16 %v1293, %v1292
        %v1342 = vpack.c.bf16 %v1295, %v1294
        %v1343 = vpack.c.bf16 %v1297, %v1296
        %v1344 = vpack.c.bf16 %v1299, %v1298
        %v1345 = vpack.c.bf16 %v1301, %v1300
        %v1346 = vpack.c.bf16 %v1303, %v1302
        %v1347 = vpack.c.bf16 %v1305, %v1304
        %v1348 = vpack.c.bf16 %v1307, %v1306
        %v1349 = vpack.c.bf16 %v1309, %v1308
        %v1350 = vpack.c.bf16 %v1311, %v1310
        %v1351 = vpack.c.bf16 %v1313, %v1312
        %v1352 = vpack.c.bf16 %v1315, %v1314
        %v1353 = vpack.c.bf16 %v1317, %v1316
        %v1354 = vpack.c.bf16 %v1319, %v1318
        %v1355 = vpack.c.bf16 %v1321, %v1320
        %v1356 = vpack.c.bf16 %v1323, %v1322
        %v1357 = vpack.c.bf16 %v1325, %v1324
        %1358 = vst [vmem:[%s310] sm:$0xff] %v1326
        %1359 = vst [vmem:[%s310 + $0x8] sm:$0xff] %v1327
        %1360 = vst [vmem:[%s310 + $0x10] sm:$0xff] %v1328
        %1361 = vst [vmem:[%s310 + $0x18] sm:$0xff] %v1329
        %1362 = vst [vmem:[%s310 + $0x20] sm:$0xff] %v1330
        %1363 = vst [vmem:[%s310 + $0x28] sm:$0xff] %v1331
        %1364 = vst [vmem:[%s310 + $0x30] sm:$0xff] %v1332
        %1365 = vst [vmem:[%s310 + $0x38] sm:$0xff] %v1333
        %1366 = vst [vmem:[%s310 + $0x40] sm:$0xff] %v1334
        %1367 = vst [vmem:[%s310 + $0x48] sm:$0xff] %v1335
        %1368 = vst [vmem:[%s310 + $0x50] sm:$0xff] %v1336
        %1369 = vst [vmem:[%s310 + $0x58] sm:$0xff] %v1337
        %1370 = vst [vmem:[%s310 + $0x60] sm:$0xff] %v1338
        %1371 = vst [vmem:[%s310 + $0x68] sm:$0xff] %v1339
        %1372 = vst [vmem:[%s310 + $0x70] sm:$0xff] %v1340
        %1373 = vst [vmem:[%s310 + $0x78] sm:$0xff] %v1341
        %1374 = vst [vmem:[%s310 + $0x80] sm:$0xff] %v1342
        %1375 = vst [vmem:[%s310 + $0x88] sm:$0xff] %v1343
        %1376 = vst [vmem:[%s310 + $0x90] sm:$0xff] %v1344
        %1377 = vst [vmem:[%s310 + $0x98] sm:$0xff] %v1345
        %1378 = vst [vmem:[%s310 + $0xa0] sm:$0xff] %v1346
        %1379 = vst [vmem:[%s310 + $0xa8] sm:$0xff] %v1347
        %1380 = vst [vmem:[%s310 + $0xb0] sm:$0xff] %v1348
        %1381 = vst [vmem:[%s310 + $0xb8] sm:$0xff] %v1349
        %1382 = vst [vmem:[%s310 + $0xc0] sm:$0xff] %v1350
        %1383 = vst [vmem:[%s310 + $0xc8] sm:$0xff] %v1351
        %1384 = vst [vmem:[%s310 + $0xd0] sm:$0xff] %v1352
        %1385 = vst [vmem:[%s310 + $0xd8] sm:$0xff] %v1353
        %1386 = vst [vmem:[%s310 + $0xe0] sm:$0xff] %v1354
        %1387 = vst [vmem:[%s310 + $0xe8] sm:$0xff] %v1355
        %1388 = vst [vmem:[%s310 + $0xf0] sm:$0xff] %v1356
        %1389 = vst [vmem:[%s310 + $0xf8] sm:$0xff] %v1357
        %1390 = vst [vmem:[%s331] sm:$0xff] %v1260
        %1391 = vst [vmem:[%s331 + $0x8] sm:$0xff] %v1261
        %s1392 = sand.u32 %s114, 1
        %s1393 = scalar_lea.sflag [#allocation5], %s1392
        %s1394 = sand.u32 %s114, 1
        %s1395 = smul.addr %s1394, 256
        %s1396 = scalar_lea.vmem [#allocation4], %s1395
        %s1397 = smul.u32 2, %s23
        %p1398 = scmp.lt.s32.totalorder %s1397, 3
        %s1399 = scalar_select %p1398, %s1397, 3
        %s1400 = smul.addr %s1399, 8
        %s1401 = scalar_lea.vmem %s4, %s1400
        // Predicated region
        $region75: #{srm0_linear_forward.1} parent=65 // pred_check
          %p1402 = pneg %p124
        $region76: #{srm0_linear_forward.1} parent=65 // pred_check_branch
          %1404 = sbr.rel (%p1402) target = $region78
        $region77: #{srm0_linear_forward.1} parent=65 // pred_region
          %s1405 = smul.u32 32, %s24
          %s1406 = smul.u32 2, %s23
          %1408 = vsyncadd %s1393, 0
          %s1409 = smul.addr %s1405, 4
          %s1410 = sadd.s32 %s1406, %s1409
          %s1411 = smul.addr %s1410, 4
          %s1412 = scalar_lea.hbm %s3, %s1411
          %s1413 = sshll.u32 %s1396, 4
          %s1414 = int_to_ptr.vmem [resolvable:$true] %s1413
          %s1415 = sshll.u32 %s1412, 4
          %s1416 = int_to_ptr.hbm [resolvable:$true] %s1415
          %1421 = dma.vmem_to_hbm [thread:$0]  %s1414, 4096, %s1416, %s1393, 128, 256, 8
        $region78: #{srm0_linear_forward.1} parent=65 // pred_fallthru
          _
        // Predicated region
        $region79: #{srm0_linear_forward.1} parent=65 // pred_check
          %p1422 = pneg %p150
        $region80: #{srm0_linear_forward.1} parent=65 // pred_check_branch
          %1424 = sbr.rel (%p1422) target = $region82
        $region81: #{srm0_linear_forward.1} parent=65 // pred_region
          %s1425 = smul.u32 2, %s23
        $region82: #{srm0_linear_forward.1} parent=65 // pred_fallthru
          _
      $region66: #{srm0_linear_forward.1} parent=5 // pred_fallthru
        _
      %p1426 = scmp.le.s32.totalorder 2, %s14
      // Predicated region
      $region83: #{srm0_linear_forward.1} parent=5 // pred_check
        %p1427 = pneg %p1426
      $region84: #{srm0_linear_forward.1} parent=5 // pred_check_branch
        %1429 = sbr.rel (%p1427) target = $region86
      $region85: #{srm0_linear_forward.1} parent=5 // pred_region
        %s1430 = ssub.s32 %s14, 2
        // Predicated region
        $region87: #{srm0_linear_forward.1} parent=85 // pred_check
          %p1431 = pneg %p130
        $region88: #{srm0_linear_forward.1} parent=85 // pred_check_branch
          %1433 = sbr.rel (%p1431) target = $region90
        $region89: #{srm0_linear_forward.1} parent=85 // pred_region
          %s1434 = sand.u32 %s115, 1
          %s1435 = scalar_lea.sflag [#allocation5], %s1434
          %s1436 = sand.u32 %s115, 1
          %s1437 = smul.addr %s1436, 256
          %s1438 = scalar_lea.vmem [#allocation4], %s1437
          %1440 = dma.done %s1435, 4096
        $region90: #{srm0_linear_forward.1} parent=85 // pred_fallthru
          _
        // Predicated region
        $region91: #{srm0_linear_forward.1} parent=85 // pred_check
          %p1441 = pneg %p156
        $region92: #{srm0_linear_forward.1} parent=85 // pred_check_branch
          %1443 = sbr.rel (%p1441) target = $region94
        $region93: #{srm0_linear_forward.1} parent=85 // pred_region
          %s1444 = smul.u32 2, %s25
          %p1445 = scmp.lt.s32.totalorder %s1444, 3
          %s1446 = scalar_select %p1445, %s1444, 3
          %s1447 = smul.addr %s1446, 8
          %s1448 = scalar_lea.vmem %s4, %s1447
        $region94: #{srm0_linear_forward.1} parent=85 // pred_fallthru
          _
      $region86: #{srm0_linear_forward.1} parent=5 // pred_fallthru
        _
    $region6: #{srm0_linear_forward.1} parent=1 // loop_footer
      %s18 = sadd.s32 1, %s14
    $region7: #{srm0_linear_forward.1} parent=1 // loop_footer_branch
      %13 = sbr.rel target = $region3
    $region8: #{srm0_linear_forward.1} parent=1 // loop_exit
      _
    %1449 = vsyncpa [#allocation5], 1
    %s1450 = scalar_lea.sflag [#allocation5], 1
    %1451 = vsyncpa %s1450, 1

</llo_original>
